<compile_context>
chip_gen: v5e
topology: v5e:2x2
jax: 0.10.0
libtpu: 0.0.40
codegen_flags: <defaults>
</compile_context>

<pallas_src>
import functools
import math

import jax
import jax.numpy as jnp
from jax.experimental import pallas as pl
from jax.experimental.pallas import tpu as pltpu


# ----------------------------------------------------------------------------
# Kernel 1: pair-bias projection  (B, S*S, P) x (H, P) -> (B, H, S*S)
# ----------------------------------------------------------------------------
def pair_bias_kernel(pair_ref, wp_ref, out_ref):
    # pair_ref: (1, T, P) bf16   rows are flattened (i, j) pairs
    # wp_ref  : (H, P)    bf16
    # out_ref : (1, H, T) bf16   bias already head-major, key index on lanes
    pb = jax.lax.dot_general(
        wp_ref[...], pair_ref[0], (((1,), (1,)), ((), ())),
        preferred_element_type=jnp.float32)                    # (H, T)
    out_ref[0] = pb.astype(out_ref.dtype)


# ----------------------------------------------------------------------------
# Kernel 2: attention (per batch, per query tile)
# ----------------------------------------------------------------------------
def ipa_attn_kernel(msa_ref, bias_ref,
                    wq_ref, bq_ref, wkv_ref, bkv_ref, bp_ref,
                    wo_ref, bo_ref,
                    out_ref,
                    qh_s, kh_s, vh_s,
                    *, n_heads, head_dim, tq):
    """One (batch, query-tile) grid step.

    msa_ref  : (1, S, D)        full sequence (block index constant across qi)
    bias_ref : (1, H, tq, S)    precomputed pair bias tile (bf16)
    wq/wkv   : pre-transposed weights (in, out); wo_ref: (H, hd, D) per-head
    scratch  : qh_s (H,tq,hd) bf16, kh_s/vh_s (H,S,hd) bf16 (persist across qi)
    """
    f32, bf16 = jnp.float32, jnp.bfloat16
    H, hd = n_heads, head_dim
    _, S, D = msa_ref.shape
    dn_std = (((1,), (0,)), ((), ()))          # standard (M,K) @ (K,N)

    # ---- K/V projection + head split: once per batch (qi == 0) ----
    @pl.when(pl.program_id(1) == 0)
    def _():
        msa_all = msa_ref[0]                   # (S, D)
        kv = jax.lax.dot_general(msa_all, wkv_ref[...], dn_std,
                                 preferred_element_type=f32) + bkv_ref[...]
        for h in range(H):
            lo = h * hd
            kh_s[h] = kv[:, lo:lo + hd].astype(bf16)
            vh_s[h] = kv[:, D + lo:D + lo + hd].astype(bf16)

    # ---- Q projection for this query tile (scale folded into q) ----
    q0 = pl.multiple_of(pl.program_id(1) * tq, tq)
    msa_q = msa_ref[0, pl.ds(q0, tq), :]       # (tq, D)
    q = (jax.lax.dot_general(msa_q, wq_ref[...], dn_std,
                             preferred_element_type=f32)
         + bq_ref[...]) * (1.0 / math.sqrt(hd))
    for h in range(H):
        qh_s[h] = q[:, h * hd:(h + 1) * hd].astype(bf16)

    # ---- scores: one batched matmul over heads (bf16 in, f32 accumulate) ----
    scores = jax.lax.dot_general(
        qh_s[...], kh_s[...], (((2,), (2,)), ((0,), (0,))),
        preferred_element_type=f32)            # (H, tq, S)
    scores = scores + bias_ref[0].astype(f32) + bp_ref[...]

    # ---- softmax over keys (f32 stats, EUP reciprocal) ----
    scores = scores - jnp.max(scores, axis=-1, keepdims=True)
    e = jnp.exp(scores)
    probs = (e * pl.reciprocal(jnp.sum(e, axis=-1, keepdims=True),
                               approx=True)).astype(bf16)
    # eval mode: attention dropout == identity

    # ---- attention * V: batched over heads ----
    ctx = jax.lax.dot_general(
        probs, vh_s[...], (((2,), (1,)), ((0,), (0,))),
        preferred_element_type=f32)            # (H, tq, hd)

    # ---- output projection: per-head W_o slices, then sum over heads ----
    outs = jax.lax.dot_general(
        ctx, wo_ref[...], (((2,), (1,)), ((0,), (0,))),
        preferred_element_type=f32)            # (H, tq, D)
    out = jnp.sum(outs, axis=0) + bo_ref[...]  # (tq, D)
    out_ref[0] = (msa_q + out).astype(out_ref.dtype)


# ----------------------------------------------------------------------------
# Tiling / VMEM helpers
# ----------------------------------------------------------------------------
def _pick_tile(total, cap, align):
    """Largest t <= cap with total % t == 0 and t % align == 0 (else total)."""
    if total <= cap:
        return total
    t = (cap // align) * align
    while t >= align:
        if total % t == 0:
            return t
        t -= align
    # TODO(synk): pad `total` instead of falling back to a single huge tile.
    return total


def _vmem_limit(bytes_est):
    # generous headroom, but never above v7x's 64 MiB physical VMEM
    return int(min(64 * 2**20, max(32 * 2**20, 2 * bytes_est)))


# ----------------------------------------------------------------------------
# Wrapper
# ----------------------------------------------------------------------------
def ipa_forward(msa, pair, coordinates, params, n_heads):
    """Pallas-backed forward of InvariantPointAttention (eval mode)."""
    del coordinates                            # reference forward never reads it
    B, S, D = msa.shape
    P = pair.shape[-1]
    H = n_heads
    hd = D // H
    bf16 = jnp.bfloat16

    # ---- one-time host-side prep (metadata reshapes + weight packing) ----
    pair_flat = pair.reshape(B, S * S, P).astype(bf16)           # bf16 pair stream
    wp_bf = params["wp"].astype(bf16)                            # (H, P)
    wq_t = params["wq"].T                                        # (D, D)
    wkv_t = jnp.concatenate([params["wk"].T, params["wv"].T], 1)  # (D, 2D)
    bkv = jnp.concatenate([params["bk"], params["bv"]], 1)        # (1, 2D)
    wo_h = params["wo"].T.reshape(H, hd, D)                       # per-head W_o
    bp3 = params["bp"].reshape(H, 1, 1)

    # ================= kernel 1: pair bias -> (B, H, S, S) bf16 ==============
    T = _pick_tile(S * S, 8 * 1024, 128)
    n_t = (S * S) // T
    est1 = 2 * (T * P * 2) + 2 * (H * T * 2) + H * P * 2
    bias_flat = pl.pallas_call(
        pair_bias_kernel,
        out_shape=jax.ShapeDtypeStruct((B, H, S * S), bf16),
        grid=(B, n_t),
        in_specs=[
            pl.BlockSpec((1, T, P), lambda b, t: (b, t, 0)),      # pair tile
            pl.BlockSpec((H, P), lambda b, t: (0, 0)),            # wp
        ],
        out_specs=pl.BlockSpec((1, H, T), lambda b, t: (b, 0, t)),
        compiler_params=pltpu.CompilerParams(
            dimension_semantics=("parallel", "parallel"),
            vmem_limit_bytes=_vmem_limit(est1)),
    )(pair_flat, wp_bf)
    bias = bias_flat.reshape(B, H, S, S)       # metadata-only reshape

    # ================= kernel 2: attention ===================================
    tq = _pick_tile(S, 128, 8)
    n_q = S // tq
    kernel = functools.partial(ipa_attn_kernel, n_heads=H, head_dim=hd, tq=tq)

    pad_hd = max(hd, 128)                      # lane padding of head scratch
    est2 = (2 * S * D * 4                      # msa block (x2 pipeline buffers)
            + 2 * H * tq * S * 2               # bias block
            + 2 * tq * D * 4                   # output block
            + 2 * (2 * D * D + D * 2 * D + H * hd * D + 4 * D) * 4   # weights
            + (H * tq + 2 * H * S) * pad_hd * 2                      # scratch
            + 4 * H * tq * S * 4)              # live f32 score-sized temps

    def fixed(shape):
        return pl.BlockSpec(shape, lambda b, qi, _n=len(shape): (0,) * _n)

    out = pl.pallas_call(
        kernel,
        out_shape=jax.ShapeDtypeStruct((B, S, D), msa.dtype),
        grid=(B, n_q),
        in_specs=[
            pl.BlockSpec((1, S, D), lambda b, qi: (b, 0, 0)),          # msa
            pl.BlockSpec((1, H, tq, S), lambda b, qi: (b, 0, qi, 0)),  # bias tile
            fixed((D, D)), fixed((1, D)),                              # wq_t, bq
            fixed((D, 2 * D)), fixed((1, 2 * D)),                      # wkv_t, bkv
            fixed((H, 1, 1)),                                          # bp
            fixed((H, hd, D)), fixed((1, D)),                          # wo_h, bo
        ],
        out_specs=pl.BlockSpec((1, tq, D), lambda b, qi: (b, qi, 0)),
        scratch_shapes=[
            pltpu.VMEM((H, tq, hd), jnp.bfloat16),   # qh_s
            pltpu.VMEM((H, S, hd), jnp.bfloat16),    # kh_s (persists across qi)
            pltpu.VMEM((H, S, hd), jnp.bfloat16),    # vh_s (persists across qi)
        ],
        compiler_params=pltpu.CompilerParams(
            # qi must be "arbitrary": K/V are computed once per batch at qi==0
            # and reused from persistent scratch on later qi steps.
            dimension_semantics=("parallel", "arbitrary"),
            vmem_limit_bytes=_vmem_limit(est2)),
    )(msa, bias,
      wq_t, params["bq"], wkv_t, bkv, bp3, wo_h, params["bo"])
    return out


# ----------------------------------------------------------------------------
# Pure-JAX reference (mirrors the PyTorch forward in eval mode)
# ----------------------------------------------------------------------------
def ref_forward(msa, pair, params, n_heads):
    B, S, D = msa.shape
    hd = D // n_heads
    q = (msa @ params["wq"].T + params["bq"]).reshape(B, S, n_heads, hd)
    k = (msa @ params["wk"].T + params["bk"]).reshape(B, S, n_heads, hd)
    v = (msa @ params["wv"].T + params["bv"]).reshape(B, S, n_heads, hd)
    scores = jnp.einsum("bihd,bjhd->bhij", q, k) / math.sqrt(hd)
    pb = jnp.einsum("bijp,hp->bhij", pair, params["wp"]) \
        + params["bp"][None, :, None, None]
    attn = jax.nn.softmax(scores + pb, axis=-1)
    out = jnp.einsum("bhij,bjhd->bihd", attn, v).reshape(B, S, D)
    out = out @ params["wo"].T + params["bo"]
    return msa + out


if __name__ == "__main__":
    B, S, D, H, P = 2, 8, 32, 4, 16   # batch, seq, msa_dim, n_heads, pair_dim

    key = jax.random.PRNGKey(0)
    ks = jax.random.split(key, 16)

    msa = jax.random.normal(ks[0], (B, S, D), jnp.float32)
    pair = jax.random.normal(ks[1], (B, S, S, P), jnp.float32)
    coords = jax.random.normal(ks[2], (B, S, 3), jnp.float32)

    def linear_params(kw, kb, out_f, in_f):
        lim = 1.0 / math.sqrt(in_f)
        w = jax.random.uniform(kw, (out_f, in_f), jnp.float32, -lim, lim)
        b = jax.random.uniform(kb, (1, out_f), jnp.float32, -lim, lim)
        return w, b

    wq, bq = linear_params(ks[3], ks[4], D, D)
    wk, bk = linear_params(ks[5], ks[6], D, D)
    wv, bv = linear_params(ks[7], ks[8], D, D)
    wo, bo = linear_params(ks[9], ks[10], D, D)
    wp, bp2 = linear_params(ks[11], ks[12], H, P)

    params = dict(wq=wq, bq=bq, wk=wk, bk=bk, wv=wv, bv=bv,
                  wo=wo, bo=bo, wp=wp, bp=bp2[0])   # bp stored as (H,)

    fwd = jax.jit(ipa_forward, static_argnames=("n_heads",))
    out = jax.block_until_ready(fwd(msa, pair, coords, params, n_heads=H))
    ref = ref_forward(msa, pair, params, H)

    assert out.shape == (B, S, D)
    max_err = float(jnp.max(jnp.abs(out - ref)))
    # bf16 pair / bias / Q / K / V / probs plus approx EUP reciprocal vs. an
    # f32 reference: relaxed tolerance (typical max err ~1e-2).
    assert jnp.allclose(out, ref, atol=5e-2, rtol=5e-2), f"max_err={max_err}"

    print("KERNEL_OK")
</pallas_src>

<mosaic_0001>
module attributes {stable_mosaic.version = 11 : i64} {
  func.func @pair_bias_kernel(%arg0: i32, %arg1: i32, %arg2: memref<1x64x16xbf16, #tpu.memory_space<vmem>>, %arg3: memref<4x16xbf16, #tpu.memory_space<vmem>>, %arg4: memref<1x4x64xbf16, #tpu.memory_space<vmem>>) attributes {dimension_semantics = [#tpu.dimension_semantics<parallel>, #tpu.dimension_semantics<parallel>], iteration_bounds = array<i64: 2, 1>, scalar_prefetch = 0 : i64, scratch_operands = 0 : i64, tpu.core_type = #tpu.core_type<tc>, window_params = [{transform_indices = @transform_0, window_bounds = array<i64: 1, 64, 16>}, {pipeline_mode = #tpu.pipeline_mode<synchronous>, transform_indices = @transform_1, window_bounds = array<i64: 4, 16>}, {transform_indices = @transform_2, window_bounds = array<i64: 1, 4, 64>}]} {
    %c0 = arith.constant 0 : index
    %c0_0 = arith.constant 0 : index
    %0 = vector.load %arg3[%c0, %c0_0] : memref<4x16xbf16, #tpu.memory_space<vmem>>, vector<4x16xbf16>
    %c0_1 = arith.constant 0 : index
    %c0_2 = arith.constant 0 : index
    %c0_3 = arith.constant 0 : index
    %1 = vector.load %arg2[%c0_1, %c0_2, %c0_3] : memref<1x64x16xbf16, #tpu.memory_space<vmem>>, vector<1x64x16xbf16>
    %2 = vector.shape_cast %1 : vector<1x64x16xbf16> to vector<64x16xbf16>
    %cst = arith.constant dense<0.000000e+00> : vector<4x64xf32>
    %3 = tpu.matmul %0, %2, %cst {dimension_numbers = #tpu.dot_dimension_numbers<[1], [1], [0], [0], [0, 0, 1, 0], [], []>} : vector<4x16xbf16>, vector<64x16xbf16>, vector<4x64xf32> -> vector<4x64xf32>
    %4 = arith.truncf %3 : vector<4x64xf32> to vector<4x64xbf16>
    %c0_4 = arith.constant 0 : index
    %c0_5 = arith.constant 0 : index
    %c0_6 = arith.constant 0 : index
    %5 = vector.load %arg4[%c0_4, %c0_5, %c0_6] : memref<1x4x64xbf16, #tpu.memory_space<vmem>>, vector<1x4x64xbf16>
    %6 = vector.shape_cast %5 : vector<1x4x64xbf16> to vector<4x64xbf16>
    %7 = vector.shape_cast %4 : vector<4x64xbf16> to vector<1x4x64xbf16>
    tpu.vector_store %arg4[%c0_4, %c0_5, %c0_6], %7 {strides = array<i32>} : memref<1x4x64xbf16, #tpu.memory_space<vmem>>, vector<1x4x64xbf16>,
    return
  }
  func.func @transform_0(%arg0: i32, %arg1: i32) -> (i32, i32, i32) {
    %c0_i32 = arith.constant 0 : i32
    %c0_i32_0 = arith.constant 0 : i32
    return %arg0, %arg1, %c0_i32 : i32, i32, i32
  }
  func.func @transform_1(%arg0: i32, %arg1: i32) -> (i32, i32) {
    %c0_i32 = arith.constant 0 : i32
    %c0_i32_0 = arith.constant 0 : i32
    %c0_i32_1 = arith.constant 0 : i32
    return %c0_i32, %c0_i32_0 : i32, i32
  }
  func.func @transform_2(%arg0: i32, %arg1: i32) -> (i32, i32, i32) {
    %c0_i32 = arith.constant 0 : i32
    %c0_i32_0 = arith.constant 0 : i32
    return %arg0, %c0_i32, %arg1 : i32, i32, i32
  }
}

module attributes {stable_mosaic.version = 11 : i64} {
  func.func @ipa_attn_kernel(%arg0: i32, %arg1: i32, %arg2: memref<1x8x32xf32, #tpu.memory_space<vmem>>, %arg3: memref<1x4x8x8xbf16, #tpu.memory_space<vmem>>, %arg4: memref<32x32xf32, #tpu.memory_space<vmem>>, %arg5: memref<1x32xf32, #tpu.memory_space<vmem>>, %arg6: memref<32x64xf32, #tpu.memory_space<vmem>>, %arg7: memref<1x64xf32, #tpu.memory_space<vmem>>, %arg8: memref<4x1x1xf32, #tpu.memory_space<vmem>>, %arg9: memref<4x8x32xf32, #tpu.memory_space<vmem>>, %arg10: memref<1x32xf32, #tpu.memory_space<vmem>>, %arg11: memref<1x8x32xf32, #tpu.memory_space<vmem>>, %arg12: memref<4x8x8xbf16, #tpu.memory_space<vmem>>, %arg13: memref<4x8x8xbf16, #tpu.memory_space<vmem>>, %arg14: memref<4x8x8xbf16, #tpu.memory_space<vmem>>) attributes {dimension_semantics = [#tpu.dimension_semantics<parallel>, #tpu.dimension_semantics<arbitrary>], iteration_bounds = array<i64: 2, 1>, scalar_prefetch = 0 : i64, scratch_operands = 3 : i64, tpu.core_type = #tpu.core_type<tc>, window_params = [{transform_indices = @transform_0, window_bounds = array<i64: 1, 8, 32>}, {transform_indices = @transform_1, window_bounds = array<i64: 1, 4, 8, 8>}, {pipeline_mode = #tpu.pipeline_mode<synchronous>, transform_indices = @transform_2, window_bounds = array<i64: 32, 32>}, {pipeline_mode = #tpu.pipeline_mode<synchronous>, transform_indices = @transform_3, window_bounds = array<i64: 1, 32>}, {pipeline_mode = #tpu.pipeline_mode<synchronous>, transform_indices = @transform_4, window_bounds = array<i64: 32, 64>}, {pipeline_mode = #tpu.pipeline_mode<synchronous>, transform_indices = @transform_5, window_bounds = array<i64: 1, 64>}, {pipeline_mode = #tpu.pipeline_mode<synchronous>, transform_indices = @transform_6, window_bounds = array<i64: 4, 1, 1>}, {pipeline_mode = #tpu.pipeline_mode<synchronous>, transform_indices = @transform_7, window_bounds = array<i64: 4, 8, 32>}, {pipeline_mode = #tpu.pipeline_mode<synchronous>, transform_indices = @transform_8, window_bounds = array<i64: 1, 32>}, {transform_indices = @transform_9, window_bounds = array<i64: 1, 8, 32>}]} {
    %c0_i32 = arith.constant 0 : i32
    %0 = arith.cmpi eq, %arg1, %c0_i32 : i32
    %1 = arith.extui %0 : i1 to i32
    %c0_i32_0 = arith.constant 0 : i32
    %2 = arith.cmpi ne, %1, %c0_i32_0 : i32
    scf.if %2 {
      %c0_46 = arith.constant 0 : index
      %c0_47 = arith.constant 0 : index
      %c0_48 = arith.constant 0 : index
      %68 = vector.load %arg2[%c0_46, %c0_47, %c0_48] : memref<1x8x32xf32, #tpu.memory_space<vmem>>, vector<1x8x32xf32>
      %69 = vector.shape_cast %68 : vector<1x8x32xf32> to vector<8x32xf32>
      %c0_49 = arith.constant 0 : index
      %c0_50 = arith.constant 0 : index
      %70 = vector.load %arg6[%c0_49, %c0_50] : memref<32x64xf32, #tpu.memory_space<vmem>>, vector<32x64xf32>
      %cst_51 = arith.constant dense<0.000000e+00> : vector<8x64xf32>
      %71 = tpu.matmul %69, %70, %cst_51 {dimension_numbers = #tpu.dot_dimension_numbers<[1], [0], [0], [1], [0, 0, 1, 1], [], []>} : vector<8x32xf32>, vector<32x64xf32>, vector<8x64xf32> -> vector<8x64xf32>
      %c0_52 = arith.constant 0 : index
      %c0_53 = arith.constant 0 : index
      %72 = vector.load %arg7[%c0_52, %c0_53] : memref<1x64xf32, #tpu.memory_space<vmem>>, vector<1x64xf32>
      %73 = vector.broadcast %72 : vector<1x64xf32> to vector<8x64xf32>
      %74 = arith.addf %71, %73 : vector<8x64xf32>
      %75 = vector.extract_strided_slice %74 {offsets = [0, 0], sizes = [8, 8], strides = [1, 1]} : vector<8x64xf32> to vector<8x8xf32>
      %76 = arith.truncf %75 : vector<8x8xf32> to vector<8x8xbf16>
      %c0_54 = arith.constant 0 : index
      %c0_55 = arith.constant 0 : index
      %c0_56 = arith.constant 0 : index
      %77 = vector.load %arg13[%c0_54, %c0_55, %c0_56] : memref<4x8x8xbf16, #tpu.memory_space<vmem>>, vector<1x8x8xbf16>
      %78 = vector.shape_cast %77 : vector<1x8x8xbf16> to vector<8x8xbf16>
      %79 = vector.shape_cast %76 : vector<8x8xbf16> to vector<1x8x8xbf16>
      tpu.vector_store %arg13[%c0_54, %c0_55, %c0_56], %79 {strides = array<i32>} : memref<4x8x8xbf16, #tpu.memory_space<vmem>>, vector<1x8x8xbf16>,
      %80 = vector.extract_strided_slice %74 {offsets = [0, 32], sizes = [8, 8], strides = [1, 1]} : vector<8x64xf32> to vector<8x8xf32>
      %81 = arith.truncf %80 : vector<8x8xf32> to vector<8x8xbf16>
      %c0_57 = arith.constant 0 : index
      %c0_58 = arith.constant 0 : index
      %c0_59 = arith.constant 0 : index
      %82 = vector.load %arg14[%c0_57, %c0_58, %c0_59] : memref<4x8x8xbf16, #tpu.memory_space<vmem>>, vector<1x8x8xbf16>
      %83 = vector.shape_cast %82 : vector<1x8x8xbf16> to vector<8x8xbf16>
      %84 = vector.shape_cast %81 : vector<8x8xbf16> to vector<1x8x8xbf16>
      tpu.vector_store %arg14[%c0_57, %c0_58, %c0_59], %84 {strides = array<i32>} : memref<4x8x8xbf16, #tpu.memory_space<vmem>>, vector<1x8x8xbf16>,
      %85 = vector.extract_strided_slice %74 {offsets = [0, 8], sizes = [8, 8], strides = [1, 1]} : vector<8x64xf32> to vector<8x8xf32>
      %86 = arith.truncf %85 : vector<8x8xf32> to vector<8x8xbf16>
      %c1_60 = arith.constant 1 : index
      %c0_61 = arith.constant 0 : index
      %c0_62 = arith.constant 0 : index
      %87 = vector.load %arg13[%c1_60, %c0_61, %c0_62] : memref<4x8x8xbf16, #tpu.memory_space<vmem>>, vector<1x8x8xbf16>
      %88 = vector.shape_cast %87 : vector<1x8x8xbf16> to vector<8x8xbf16>
      %89 = vector.shape_cast %86 : vector<8x8xbf16> to vector<1x8x8xbf16>
      tpu.vector_store %arg13[%c1_60, %c0_61, %c0_62], %89 {strides = array<i32>} : memref<4x8x8xbf16, #tpu.memory_space<vmem>>, vector<1x8x8xbf16>,
      %90 = vector.extract_strided_slice %74 {offsets = [0, 40], sizes = [8, 8], strides = [1, 1]} : vector<8x64xf32> to vector<8x8xf32>
      %91 = arith.truncf %90 : vector<8x8xf32> to vector<8x8xbf16>
      %c1_63 = arith.constant 1 : index
      %c0_64 = arith.constant 0 : index
      %c0_65 = arith.constant 0 : index
      %92 = vector.load %arg14[%c1_63, %c0_64, %c0_65] : memref<4x8x8xbf16, #tpu.memory_space<vmem>>, vector<1x8x8xbf16>
      %93 = vector.shape_cast %92 : vector<1x8x8xbf16> to vector<8x8xbf16>
      %94 = vector.shape_cast %91 : vector<8x8xbf16> to vector<1x8x8xbf16>
      tpu.vector_store %arg14[%c1_63, %c0_64, %c0_65], %94 {strides = array<i32>} : memref<4x8x8xbf16, #tpu.memory_space<vmem>>, vector<1x8x8xbf16>,
      %95 = vector.extract_strided_slice %74 {offsets = [0, 16], sizes = [8, 8], strides = [1, 1]} : vector<8x64xf32> to vector<8x8xf32>
      %96 = arith.truncf %95 : vector<8x8xf32> to vector<8x8xbf16>
      %c2_66 = arith.constant 2 : index
      %c0_67 = arith.constant 0 : index
      %c0_68 = arith.constant 0 : index
      %97 = vector.load %arg13[%c2_66, %c0_67, %c0_68] : memref<4x8x8xbf16, #tpu.memory_space<vmem>>, vector<1x8x8xbf16>
      %98 = vector.shape_cast %97 : vector<1x8x8xbf16> to vector<8x8xbf16>
      %99 = vector.shape_cast %96 : vector<8x8xbf16> to vector<1x8x8xbf16>
      tpu.vector_store %arg13[%c2_66, %c0_67, %c0_68], %99 {strides = array<i32>} : memref<4x8x8xbf16, #tpu.memory_space<vmem>>, vector<1x8x8xbf16>,
      %100 = vector.extract_strided_slice %74 {offsets = [0, 48], sizes = [8, 8], strides = [1, 1]} : vector<8x64xf32> to vector<8x8xf32>
      %101 = arith.truncf %100 : vector<8x8xf32> to vector<8x8xbf16>
      %c2_69 = arith.constant 2 : index
      %c0_70 = arith.constant 0 : index
      %c0_71 = arith.constant 0 : index
      %102 = vector.load %arg14[%c2_69, %c0_70, %c0_71] : memref<4x8x8xbf16, #tpu.memory_space<vmem>>, vector<1x8x8xbf16>
      %103 = vector.shape_cast %102 : vector<1x8x8xbf16> to vector<8x8xbf16>
      %104 = vector.shape_cast %101 : vector<8x8xbf16> to vector<1x8x8xbf16>
      tpu.vector_store %arg14[%c2_69, %c0_70, %c0_71], %104 {strides = array<i32>} : memref<4x8x8xbf16, #tpu.memory_space<vmem>>, vector<1x8x8xbf16>,
      %105 = vector.extract_strided_slice %74 {offsets = [0, 24], sizes = [8, 8], strides = [1, 1]} : vector<8x64xf32> to vector<8x8xf32>
      %106 = arith.truncf %105 : vector<8x8xf32> to vector<8x8xbf16>
      %c3_72 = arith.constant 3 : index
      %c0_73 = arith.constant 0 : index
      %c0_74 = arith.constant 0 : index
      %107 = vector.load %arg13[%c3_72, %c0_73, %c0_74] : memref<4x8x8xbf16, #tpu.memory_space<vmem>>, vector<1x8x8xbf16>
      %108 = vector.shape_cast %107 : vector<1x8x8xbf16> to vector<8x8xbf16>
      %109 = vector.shape_cast %106 : vector<8x8xbf16> to vector<1x8x8xbf16>
      tpu.vector_store %arg13[%c3_72, %c0_73, %c0_74], %109 {strides = array<i32>} : memref<4x8x8xbf16, #tpu.memory_space<vmem>>, vector<1x8x8xbf16>,
      %110 = vector.extract_strided_slice %74 {offsets = [0, 56], sizes = [8, 8], strides = [1, 1]} : vector<8x64xf32> to vector<8x8xf32>
      %111 = arith.truncf %110 : vector<8x8xf32> to vector<8x8xbf16>
      %c3_75 = arith.constant 3 : index
      %c0_76 = arith.constant 0 : index
      %c0_77 = arith.constant 0 : index
      %112 = vector.load %arg14[%c3_75, %c0_76, %c0_77] : memref<4x8x8xbf16, #tpu.memory_space<vmem>>, vector<1x8x8xbf16>
      %113 = vector.shape_cast %112 : vector<1x8x8xbf16> to vector<8x8xbf16>
      %114 = vector.shape_cast %111 : vector<8x8xbf16> to vector<1x8x8xbf16>
      tpu.vector_store %arg14[%c3_75, %c0_76, %c0_77], %114 {strides = array<i32>} : memref<4x8x8xbf16, #tpu.memory_space<vmem>>, vector<1x8x8xbf16>,
    } else {
    }
    %c8_i32 = arith.constant 8 : i32
    %3 = arith.muli %arg1, %c8_i32 : i32
    %4 = tpu.assume_multiple %3, 8 : i32
    %c0 = arith.constant 0 : index
    %5 = arith.index_cast %4 : i32 to index
    %c0_1 = arith.constant 0 : index
    %6 = vector.load %arg2[%c0, %5, %c0_1] : memref<1x8x32xf32, #tpu.memory_space<vmem>>, vector<1x8x32xf32>
    %7 = vector.shape_cast %6 : vector<1x8x32xf32> to vector<8x32xf32>
    %c0_2 = arith.constant 0 : index
    %c0_3 = arith.constant 0 : index
    %8 = vector.load %arg4[%c0_2, %c0_3] : memref<32x32xf32, #tpu.memory_space<vmem>>, vector<32x32xf32>
    %cst = arith.constant dense<0.000000e+00> : vector<8x32xf32>
    %9 = tpu.matmul %7, %8, %cst {dimension_numbers = #tpu.dot_dimension_numbers<[1], [0], [0], [1], [0, 0, 1, 1], [], []>} : vector<8x32xf32>, vector<32x32xf32>, vector<8x32xf32> -> vector<8x32xf32>
    %c0_4 = arith.constant 0 : index
    %c0_5 = arith.constant 0 : index
    %10 = vector.load %arg5[%c0_4, %c0_5] : memref<1x32xf32, #tpu.memory_space<vmem>>, vector<1x32xf32>
    %11 = vector.broadcast %10 : vector<1x32xf32> to vector<8x32xf32>
    %12 = arith.addf %9, %11 : vector<8x32xf32>
    %cst_6 = arith.constant 0.353553385 : f32
    %13 = vector.broadcast %cst_6 : f32 to vector<8x32xf32>
    %14 = arith.mulf %12, %13 : vector<8x32xf32>
    %15 = vector.extract_strided_slice %14 {offsets = [0, 0], sizes = [8, 8], strides = [1, 1]} : vector<8x32xf32> to vector<8x8xf32>
    %16 = arith.truncf %15 : vector<8x8xf32> to vector<8x8xbf16>
    %c0_7 = arith.constant 0 : index
    %c0_8 = arith.constant 0 : index
    %c0_9 = arith.constant 0 : index
    %17 = vector.load %arg12[%c0_7, %c0_8, %c0_9] : memref<4x8x8xbf16, #tpu.memory_space<vmem>>, vector<1x8x8xbf16>
    %18 = vector.shape_cast %17 : vector<1x8x8xbf16> to vector<8x8xbf16>
    %19 = vector.shape_cast %16 : vector<8x8xbf16> to vector<1x8x8xbf16>
    tpu.vector_store %arg12[%c0_7, %c0_8, %c0_9], %19 {strides = array<i32>} : memref<4x8x8xbf16, #tpu.memory_space<vmem>>, vector<1x8x8xbf16>,
    %20 = vector.extract_strided_slice %14 {offsets = [0, 8], sizes = [8, 8], strides = [1, 1]} : vector<8x32xf32> to vector<8x8xf32>
    %21 = arith.truncf %20 : vector<8x8xf32> to vector<8x8xbf16>
    %c1 = arith.constant 1 : index
    %c0_10 = arith.constant 0 : index
    %c0_11 = arith.constant 0 : index
    %22 = vector.load %arg12[%c1, %c0_10, %c0_11] : memref<4x8x8xbf16, #tpu.memory_space<vmem>>, vector<1x8x8xbf16>
    %23 = vector.shape_cast %22 : vector<1x8x8xbf16> to vector<8x8xbf16>
    %24 = vector.shape_cast %21 : vector<8x8xbf16> to vector<1x8x8xbf16>
    tpu.vector_store %arg12[%c1, %c0_10, %c0_11], %24 {strides = array<i32>} : memref<4x8x8xbf16, #tpu.memory_space<vmem>>, vector<1x8x8xbf16>,
    %25 = vector.extract_strided_slice %14 {offsets = [0, 16], sizes = [8, 8], strides = [1, 1]} : vector<8x32xf32> to vector<8x8xf32>
    %26 = arith.truncf %25 : vector<8x8xf32> to vector<8x8xbf16>
    %c2 = arith.constant 2 : index
    %c0_12 = arith.constant 0 : index
    %c0_13 = arith.constant 0 : index
    %27 = vector.load %arg12[%c2, %c0_12, %c0_13] : memref<4x8x8xbf16, #tpu.memory_space<vmem>>, vector<1x8x8xbf16>
    %28 = vector.shape_cast %27 : vector<1x8x8xbf16> to vector<8x8xbf16>
    %29 = vector.shape_cast %26 : vector<8x8xbf16> to vector<1x8x8xbf16>
    tpu.vector_store %arg12[%c2, %c0_12, %c0_13], %29 {strides = array<i32>} : memref<4x8x8xbf16, #tpu.memory_space<vmem>>, vector<1x8x8xbf16>,
    %30 = vector.extract_strided_slice %14 {offsets = [0, 24], sizes = [8, 8], strides = [1, 1]} : vector<8x32xf32> to vector<8x8xf32>
    %31 = arith.truncf %30 : vector<8x8xf32> to vector<8x8xbf16>
    %c3 = arith.constant 3 : index
    %c0_14 = arith.constant 0 : index
    %c0_15 = arith.constant 0 : index
    %32 = vector.load %arg12[%c3, %c0_14, %c0_15] : memref<4x8x8xbf16, #tpu.memory_space<vmem>>, vector<1x8x8xbf16>
    %33 = vector.shape_cast %32 : vector<1x8x8xbf16> to vector<8x8xbf16>
    %34 = vector.shape_cast %31 : vector<8x8xbf16> to vector<1x8x8xbf16>
    tpu.vector_store %arg12[%c3, %c0_14, %c0_15], %34 {strides = array<i32>} : memref<4x8x8xbf16, #tpu.memory_space<vmem>>, vector<1x8x8xbf16>,
    %c0_16 = arith.constant 0 : index
    %c0_17 = arith.constant 0 : index
    %c0_18 = arith.constant 0 : index
    %35 = vector.load %arg12[%c0_16, %c0_17, %c0_18] : memref<4x8x8xbf16, #tpu.memory_space<vmem>>, vector<4x8x8xbf16>
    %c0_19 = arith.constant 0 : index
    %c0_20 = arith.constant 0 : index
    %c0_21 = arith.constant 0 : index
    %36 = vector.load %arg13[%c0_19, %c0_20, %c0_21] : memref<4x8x8xbf16, #tpu.memory_space<vmem>>, vector<4x8x8xbf16>
    %cst_22 = arith.constant dense<0.000000e+00> : vector<4x8x8xf32>
    %37 = tpu.matmul %35, %36, %cst_22 {dimension_numbers = #tpu.dot_dimension_numbers<[2], [2], [1], [1], [0, 0, 0, 1, 1, 1], [0], [0]>} : vector<4x8x8xbf16>, vector<4x8x8xbf16>, vector<4x8x8xf32> -> vector<4x8x8xf32>
    %c0_23 = arith.constant 0 : index
    %c0_24 = arith.constant 0 : index
    %c0_25 = arith.constant 0 : index
    %c0_26 = arith.constant 0 : index
    %38 = vector.load %arg3[%c0_23, %c0_24, %c0_25, %c0_26] : memref<1x4x8x8xbf16, #tpu.memory_space<vmem>>, vector<1x4x8x8xbf16>
    %39 = vector.shape_cast %38 : vector<1x4x8x8xbf16> to vector<4x8x8xbf16>
    %40 = arith.extf %39 : vector<4x8x8xbf16> to vector<4x8x8xf32>
    %41 = arith.addf %37, %40 : vector<4x8x8xf32>
    %c0_27 = arith.constant 0 : index
    %c0_28 = arith.constant 0 : index
    %c0_29 = arith.constant 0 : index
    %42 = vector.load %arg8[%c0_27, %c0_28, %c0_29] : memref<4x1x1xf32, #tpu.memory_space<vmem>>, vector<4x1x1xf32>
    %43 = vector.broadcast %42 : vector<4x1x1xf32> to vector<4x8x8xf32>
    %44 = arith.addf %41, %43 : vector<4x8x8xf32>
    %cst_30 = arith.constant dense<0xFF800000> : vector<4x8xf32>
    %45 = vector.multi_reduction <maximumf>, %44, %cst_30 [2] : vector<4x8x8xf32> to vector<4x8xf32>
    %46 = vector.shape_cast %45 : vector<4x8xf32> to vector<4x8x1xf32>
    %47 = vector.broadcast %46 : vector<4x8x1xf32> to vector<4x8x8xf32>
    %48 = arith.subf %44, %47 : vector<4x8x8xf32>
    %49 = math.exp %48 : vector<4x8x8xf32>
    %cst_31 = arith.constant dense<0.000000e+00> : vector<4x8xf32>
    %50 = vector.multi_reduction <add>, %49, %cst_31 [2] : vector<4x8x8xf32> to vector<4x8xf32>
    %51 = vector.shape_cast %50 : vector<4x8xf32> to vector<4x8x1xf32>
    %52 = tpu.reciprocal %51 {approx = true} : vector<4x8x1xf32> -> vector<4x8x1xf32>
    %53 = vector.broadcast %52 : vector<4x8x1xf32> to vector<4x8x8xf32>
    %54 = arith.mulf %49, %53 : vector<4x8x8xf32>
    %55 = arith.truncf %54 : vector<4x8x8xf32> to vector<4x8x8xbf16>
    %c0_32 = arith.constant 0 : index
    %c0_33 = arith.constant 0 : index
    %c0_34 = arith.constant 0 : index
    %56 = vector.load %arg14[%c0_32, %c0_33, %c0_34] : memref<4x8x8xbf16, #tpu.memory_space<vmem>>, vector<4x8x8xbf16>
    %cst_35 = arith.constant dense<0.000000e+00> : vector<4x8x8xf32>
    %57 = tpu.matmul %55, %56, %cst_35 {dimension_numbers = #tpu.dot_dimension_numbers<[2], [1], [1], [2], [0, 0, 0, 1, 1, 2], [0], [0]>} : vector<4x8x8xbf16>, vector<4x8x8xbf16>, vector<4x8x8xf32> -> vector<4x8x8xf32>
    %c0_36 = arith.constant 0 : index
    %c0_37 = arith.constant 0 : index
    %c0_38 = arith.constant 0 : index
    %58 = vector.load %arg9[%c0_36, %c0_37, %c0_38] : memref<4x8x32xf32, #tpu.memory_space<vmem>>, vector<4x8x32xf32>
    %cst_39 = arith.constant dense<0.000000e+00> : vector<4x8x32xf32>
    %59 = tpu.matmul %57, %58, %cst_39 {dimension_numbers = #tpu.dot_dimension_numbers<[2], [1], [1], [2], [0, 0, 0, 1, 1, 2], [0], [0]>} : vector<4x8x8xf32>, vector<4x8x32xf32>, vector<4x8x32xf32> -> vector<4x8x32xf32>
    %cst_40 = arith.constant dense<0.000000e+00> : vector<8x32xf32>
    %60 = vector.multi_reduction <add>, %59, %cst_40 [0] : vector<4x8x32xf32> to vector<8x32xf32>
    %c0_41 = arith.constant 0 : index
    %c0_42 = arith.constant 0 : index
    %61 = vector.load %arg10[%c0_41, %c0_42] : memref<1x32xf32, #tpu.memory_space<vmem>>, vector<1x32xf32>
    %62 = vector.broadcast %61 : vector<1x32xf32> to vector<8x32xf32>
    %63 = arith.addf %60, %62 : vector<8x32xf32>
    %64 = arith.addf %7, %63 : vector<8x32xf32>
    %c0_43 = arith.constant 0 : index
    %c0_44 = arith.constant 0 : index
    %c0_45 = arith.constant 0 : index
    %65 = vector.load %arg11[%c0_43, %c0_44, %c0_45] : memref<1x8x32xf32, #tpu.memory_space<vmem>>, vector<1x8x32xf32>
    %66 = vector.shape_cast %65 : vector<1x8x32xf32> to vector<8x32xf32>
    %67 = vector.shape_cast %64 : vector<8x32xf32> to vector<1x8x32xf32>
    tpu.vector_store %arg11[%c0_43, %c0_44, %c0_45], %67 {strides = array<i32>} : memref<1x8x32xf32, #tpu.memory_space<vmem>>, vector<1x8x32xf32>,
    return
  }
  func.func @transform_0(%arg0: i32, %arg1: i32) -> (i32, i32, i32) {
    %c0_i32 = arith.constant 0 : i32
    %c0_i32_0 = arith.constant 0 : i32
    %c0_i32_1 = arith.constant 0 : i32
    return %arg0, %c0_i32, %c0_i32_0 : i32, i32, i32
  }
  func.func @transform_1(%arg0: i32, %arg1: i32) -> (i32, i32, i32, i32) {
    %c0_i32 = arith.constant 0 : i32
    %c0_i32_0 = arith.constant 0 : i32
    %c0_i32_1 = arith.constant 0 : i32
    return %arg0, %c0_i32, %arg1, %c0_i32_0 : i32, i32, i32, i32
  }
  func.func @transform_2(%arg0: i32, %arg1: i32) -> (i32, i32) {
    %c0_i32 = arith.constant 0 : i32
    %c0_i32_0 = arith.constant 0 : i32
    %c0_i32_1 = arith.constant 0 : i32
    return %c0_i32, %c0_i32_0 : i32, i32
  }
  func.func @transform_3(%arg0: i32, %arg1: i32) -> (i32, i32) {
    %c0_i32 = arith.constant 0 : i32
    %c0_i32_0 = arith.constant 0 : i32
    %c0_i32_1 = arith.constant 0 : i32
    return %c0_i32, %c0_i32_0 : i32, i32
  }
  func.func @transform_4(%arg0: i32, %arg1: i32) -> (i32, i32) {
    %c0_i32 = arith.constant 0 : i32
    %c0_i32_0 = arith.constant 0 : i32
    %c0_i32_1 = arith.constant 0 : i32
    return %c0_i32, %c0_i32_0 : i32, i32
  }
  func.func @transform_5(%arg0: i32, %arg1: i32) -> (i32, i32) {
    %c0_i32 = arith.constant 0 : i32
    %c0_i32_0 = arith.constant 0 : i32
    %c0_i32_1 = arith.constant 0 : i32
    return %c0_i32, %c0_i32_0 : i32, i32
  }
  func.func @transform_6(%arg0: i32, %arg1: i32) -> (i32, i32, i32) {
    %c0_i32 = arith.constant 0 : i32
    %c0_i32_0 = arith.constant 0 : i32
    %c0_i32_1 = arith.constant 0 : i32
    %c0_i32_2 = arith.constant 0 : i32
    return %c0_i32, %c0_i32_0, %c0_i32_1 : i32, i32, i32
  }
  func.func @transform_7(%arg0: i32, %arg1: i32) -> (i32, i32, i32) {
    %c0_i32 = arith.constant 0 : i32
    %c0_i32_0 = arith.constant 0 : i32
    %c0_i32_1 = arith.constant 0 : i32
    %c0_i32_2 = arith.constant 0 : i32
    return %c0_i32, %c0_i32_0, %c0_i32_1 : i32, i32, i32
  }
  func.func @transform_8(%arg0: i32, %arg1: i32) -> (i32, i32) {
    %c0_i32 = arith.constant 0 : i32
    %c0_i32_0 = arith.constant 0 : i32
    %c0_i32_1 = arith.constant 0 : i32
    return %c0_i32, %c0_i32_0 : i32, i32
  }
  func.func @transform_9(%arg0: i32, %arg1: i32) -> (i32, i32, i32) {
    %c0_i32 = arith.constant 0 : i32
    %c0_i32_0 = arith.constant 0 : i32
    return %arg0, %arg1, %c0_i32 : i32, i32, i32
  }
}

</mosaic_0001>

<llo_original>
// kernel: ipa_forward.2
$region0: #{ipa_forward.2}
  #allocation0 [shape = 'u32[]', space=smem, size = 0x4, offset = 0x4, fixed_abs, tag = 'smem constant byte address 0x4 - core index']
  #allocation1 [shape = 'u32[72,128]{1,0:T(1,128)}', space=vmem, size = 0x9000, scoped, tag = 'internal scratch']
  %s0 = inlined_call_operand.vmem [shape: bf16[2,64,16], index: 0, kind: input, shape index: {}]
  %s1 = inlined_call_operand.vmem [shape: bf16[4,16], index: 1, kind: input, shape index: {}]
  %s2 = inlined_call_operand.vmem [shape: bf16[2,4,64], index: 2, kind: output, shape index: {}]
  %s3 = sld [smem:[#allocation0]]
  $region41: #{ipa_forward.2} parent=0
    _
  %s5 = ssub.s32 1, %s3
  %s6 = scalar_select 0, %s5, %s3
  loop: start=0, step=1, limit=4
  $region2: #{ipa_forward.2} parent=0 // loop_pre_header
    _
  $region3: #{ipa_forward.2} parent=0 // loop_header
    %s8 = sphi 0, %s12
    %p9 = scmp.ge.s32.totalorder %s8, 4
    %s15 = sphi 0, %s27
    %s16 = sphi 0, %s23
    %s17 = sphi 0, %s15
    %s18 = sphi 0, %s16
    %s19 = sphi 0, %s17
    %s20 = sphi 0, %s18
    %s32 = sphi 0, %s34
    %s35 = sphi 0, %s32
    %s36 = sphi 0, %s35
    %s52 = sphi 0, %s36
    %s56 = sphi 0, %s56
    %s58 = sphi 0, %s56
    %s59 = sphi 0, %s58
    %s73 = sphi 0, %s59
    %s81 = sphi 0, %s83
    %s84 = sphi 0, %s81
    %s85 = sphi 0, %s84
    %s101 = sphi 0, %s85
  $region4: #{ipa_forward.2} parent=0 // loop_header_branch
    %11 = sbr.rel (%p9) target = $region8
  $region5: #{ipa_forward.2} parent=0 // loop_body
    %s13 = ssub.s32 %s8, 1
    %s14 = ssub.s32 %s8, 2
    %s21 = sadd.s32 1, %s16
    %p22 = scmp.ge.s32.totalorder %s21, 1
    %s23 = scalar_select %p22, 0, %s21
    %s24 = sadd.s32 1, %s15
    %s25 = scalar_select %p22, %s24, %s15
    %p26 = scmp.ge.s32.totalorder %s25, 2
    %s27 = scalar_select %p26, 0, %s25
    %s28 = ssub.s32 %s15, %s27
    %s29 = ssub.s32 %s16, %s23
    %s30 = sor.u32 %s28, %s29
    %p31 = scmp.eq.s32.totalorder %s30, 0
    %s33 = sadd.s32 %s32, 1
    %s34 = scalar_select %p31, %s32, %s33
    %p37 = pneg %p31
    %p38 = scmp.eq.s32.totalorder %s8, 1
    %p39 = por %p37, %p38
    %p40 = scmp.ne.s32.totalorder %s32, %s35
    %p41 = scmp.eq.s32.totalorder %s8, 0
    %p42 = por %p40, %p41
    %p43 = scmp.ne.s32.totalorder %s32, %s35
    %p44 = scmp.eq.s32.totalorder %s13, 1
    %p45 = por %p43, %p44
    %p46 = scmp.ne.s32.totalorder %s35, %s36
    %p47 = scmp.eq.s32.totalorder %s13, 0
    %p48 = por %p46, %p47
    %p49 = scmp.ne.s32.totalorder %s35, %s36
    %p50 = scmp.eq.s32.totalorder %s14, 1
    %p51 = por %p49, %p50
    %p53 = scmp.ne.s32.totalorder %s36, %s52
    %p54 = scmp.eq.s32.totalorder %s14, 0
    %p55 = por %p53, %p54
    %s57 = sadd.s32 %s56, 1
    %p60 = scmp.eq.s32.totalorder %s8, 1
    %p61 = scmp.ne.s32.totalorder %s56, %s58
    %p62 = scmp.eq.s32.totalorder %s8, 0
    %p63 = por %p61, %p62
    %p64 = scmp.ne.s32.totalorder %s56, %s58
    %p65 = scmp.eq.s32.totalorder %s13, 1
    %p66 = por %p64, %p65
    %p67 = scmp.ne.s32.totalorder %s58, %s59
    %p68 = scmp.eq.s32.totalorder %s13, 0
    %p69 = por %p67, %p68
    %p70 = scmp.ne.s32.totalorder %s58, %s59
    %p71 = scmp.eq.s32.totalorder %s14, 1
    %p72 = por %p70, %p71
    %p74 = scmp.ne.s32.totalorder %s59, %s73
    %p75 = scmp.eq.s32.totalorder %s14, 0
    %p76 = por %p74, %p75
    %s77 = ssub.s32 %s15, %s27
    %s78 = ssub.s32 %s16, %s23
    %s79 = sor.u32 %s77, %s78
    %p80 = scmp.eq.s32.totalorder %s79, 0
    %s82 = sadd.s32 %s81, 1
    %s83 = scalar_select %p80, %s81, %s82
    %p86 = pneg %p80
    %p87 = scmp.eq.s32.totalorder %s8, 1
    %p88 = por %p86, %p87
    %p89 = scmp.ne.s32.totalorder %s81, %s84
    %p90 = scmp.eq.s32.totalorder %s8, 0
    %p91 = por %p89, %p90
    %p92 = scmp.ne.s32.totalorder %s81, %s84
    %p93 = scmp.eq.s32.totalorder %s13, 1
    %p94 = por %p92, %p93
    %p95 = scmp.ne.s32.totalorder %s84, %s85
    %p96 = scmp.eq.s32.totalorder %s13, 0
    %p97 = por %p95, %p96
    %p98 = scmp.ne.s32.totalorder %s84, %s85
    %p99 = scmp.eq.s32.totalorder %s14, 1
    %p100 = por %p98, %p99
    %p102 = scmp.ne.s32.totalorder %s85, %s101
    %p103 = scmp.eq.s32.totalorder %s14, 0
    %p104 = por %p102, %p103
    %p105 = scmp.le.s32.totalorder 1, %s8
    %p106 = scmp.lt.s32.totalorder %s8, 3
    %p107 = pnand %p105, %p106
    %p108 = pneg %p107
    // Predicated region
    $region9: #{ipa_forward.2} parent=5 // pred_check
      _
    $region10: #{ipa_forward.2} parent=5 // pred_check_branch
      %110 = sbr.rel (%p107) target = $region12
    $region11: #{ipa_forward.2} parent=5 // pred_region
      %s111 = ssub.s32 %s8, 1
      // Predicated region
      $region13: #{ipa_forward.2} parent=11 // pred_check
        %p112 = pneg %p69
      $region14: #{ipa_forward.2} parent=11 // pred_check_branch
        %114 = sbr.rel (%p112) target = $region16
      $region15: #{ipa_forward.2} parent=11 // pred_region
        _
      $region16: #{ipa_forward.2} parent=11 // pred_fallthru
        _
    $region12: #{ipa_forward.2} parent=5 // pred_fallthru
      _
    %p115 = scmp.lt.s32.totalorder %s8, 2
    // Predicated region
    $region17: #{ipa_forward.2} parent=5 // pred_check
      %p116 = pneg %p115
    $region18: #{ipa_forward.2} parent=5 // pred_check_branch
      %118 = sbr.rel (%p116) target = $region20
    $region19: #{ipa_forward.2} parent=5 // pred_region
      // Predicated region
      $region21: #{ipa_forward.2} parent=19 // pred_check
        %p119 = pneg %p42
      $region22: #{ipa_forward.2} parent=19 // pred_check_branch
        %121 = sbr.rel (%p119) target = $region24
      $region23: #{ipa_forward.2} parent=19 // pred_region
        %s122 = smul.u32 8, %s16
        %p123 = scmp.lt.s32.totalorder %s15, 1
        %s124 = scalar_select %p123, %s15, 1
        %p125 = scmp.lt.s32.totalorder %s122, 7
        %s126 = scalar_select %p125, %s122, 7
        %s127 = smul.addr %s124, 8
        %s128 = sadd.s32 %s126, %s127
        %s129 = smul.addr %s128, 4
        %s130 = scalar_lea.vmem %s0, %s129
        %s131 = smul.u32 8, %s16
      $region24: #{ipa_forward.2} parent=19 // pred_fallthru
        _
    $region20: #{ipa_forward.2} parent=5 // pred_fallthru
      _
    %p132 = scmp.le.s32.totalorder 1, %s8
    %p133 = scmp.lt.s32.totalorder %s8, 3
    %p134 = pnand %p132, %p133
    %p135 = pneg %p134
    // Predicated region
    $region25: #{ipa_forward.2} parent=5 // pred_check
      _
    $region26: #{ipa_forward.2} parent=5 // pred_check_branch
      %137 = sbr.rel (%p134) target = $region28
    $region27: #{ipa_forward.2} parent=5 // pred_region
      %s138 = ssub.s32 %s8, 1
      %s139 = smul.u32 8, %s18
      %p140 = scmp.lt.s32.totalorder %s17, 1
      %s141 = scalar_select %p140, %s17, 1
      %p142 = scmp.lt.s32.totalorder %s139, 7
      %s143 = scalar_select %p142, %s139, 7
      %s144 = smul.addr %s141, 8
      %s145 = sadd.s32 %s143, %s144
      %s146 = smul.addr %s145, 4
      %s147 = scalar_lea.vmem %s0, %s146
      %p148 = pneg %p48
      %p149 = pneg %p45
      %p150 = pneg %p69
      %p151 = pneg %p66
      %p152 = pneg %p97
      %p153 = pneg %p94
      %p154 = scmp.lt.s32.totalorder %s17, 1
      %s155 = scalar_select %p154, %s17, 1
      %p156 = scmp.lt.s32.totalorder %s18, 0
      %s157 = scalar_select %p156, %s18, 0
      %s158 = sadd.s32 %s157, %s155
      %s159 = smul.addr %s158, 2
      %s160 = scalar_lea.vmem %s2, %s159
      %s161 = smul.u32 8, %s18
      %p162 = scmp.lt.s32.totalorder %s17, 1
      %s163 = scalar_select %p162, %s17, 1
      %p164 = scmp.lt.s32.totalorder %s161, 7
      %s165 = scalar_select %p164, %s161, 7
      %s166 = smul.addr %s163, 8
      %s167 = sadd.s32 %s165, %s166
      %s168 = smul.addr %s167, 4
      %s169 = scalar_lea.vmem %s0, %s168
      %s170 = smul.u32 8, %s18
      %p171 = scmp.lt.s32.totalorder %s17, 1
      %s172 = scalar_select %p171, %s17, 1
      %p173 = scmp.lt.s32.totalorder %s18, 0
      %s174 = scalar_select %p173, %s18, 0
      %s175 = sadd.s32 %s174, %s172
      %s176 = smul.addr %s175, 2
      %s177 = scalar_lea.vmem %s2, %s176
      %v179 = vld [vmem:[%s1] sm:$0x3]
      %v180 = vld [vmem:[%s169] sm:$0xf]
      %v181 = vld [vmem:[%s169 + $0x4] sm:$0xf]
      %v182 = vld [vmem:[%s169 + $0x8] sm:$0xf]
      %v183 = vld [vmem:[%s169 + $0xc] sm:$0xf]
      %v184 = vld [vmem:[%s169 + $0x10] sm:$0xf]
      %v185 = vld [vmem:[%s169 + $0x14] sm:$0xf]
      %v186 = vld [vmem:[%s169 + $0x18] sm:$0xf]
      %v187 = vld [vmem:[%s169 + $0x1c] sm:$0xf]
      %v196 = vunpack.c.l.b16 %v180
      %v197 = vunpack.c.l.b16 %v181
      %v198 = vunpack.c.l.b16 %v182
      %v199 = vunpack.c.l.b16 %v183
      %v200 = vunpack.c.l.b16 %v184
      %v201 = vunpack.c.l.b16 %v185
      %v202 = vunpack.c.l.b16 %v186
      %v203 = vunpack.c.l.b16 %v187
      %v204 = vpack.c.b16 %v197, %v196
      %v205 = vpack.c.b16 %v199, %v198
      %v206 = vpack.c.b16 %v201, %v200
      %v207 = vpack.c.b16 %v203, %v202
      %vm208 = vcmask 130048
      %v210 = vsel %vm208, %v179, 0
      %v213 = vsel %vm208, %v204, 0
      %v216 = vsel %vm208, %v205, 0
      %v219 = vsel %vm208, %v206, 0
      %v222 = vsel %vm208, %v207, 0
      %224 = vmatpush.bf16.xpose.msra.mxu0 0
      %225 = vmatpush.bf16.xpose.msra.mxu0 0
      %226 = vmatpush.bf16.xpose.msra.mxu0 0
      %227 = vmatpush.bf16.xpose.msra.mxu0 0
      %228 = vmatpush.bf16.xpose.msra.mxu0 %v222
      %229 = vmatpush.bf16.xpose.msra.mxu0 %v219
      %230 = vmatpush.bf16.xpose.msra.mxu0 %v216
      %231 = vmatpush.bf16.xpose.msra.mxu0 %v213
      %232 = vmatmul.bf16.gmra.mxu0 %v210
      %v233 = vpop.f32.mrf.mxu0
      %v234 = vadd.f32 0.0, %v233
      %v235 = vpop.f32.mrf.mxu0
      %236 = vdwg.mxu0
      %v237 = vpack.c.bf16 %v234, %v234
      %vm238 = vcmask 517120
      %239 = vst.msk [vmem:[%s177] sm:$0x3] %vm238, %v237
      %p240 = scmp.lt.s32.totalorder %s17, 1
      %s241 = scalar_select %p240, %s17, 1
      %p242 = scmp.lt.s32.totalorder %s18, 0
      %s243 = scalar_select %p242, %s18, 0
      %s244 = sadd.s32 %s243, %s241
      %s245 = smul.addr %s244, 2
      %s246 = scalar_lea.vmem %s2, %s245
      // Predicated region
      $region29: #{ipa_forward.2} parent=27 // pred_check
        %p247 = pneg %p94
      $region30: #{ipa_forward.2} parent=27 // pred_check_branch
        %249 = sbr.rel (%p247) target = $region32
      $region31: #{ipa_forward.2} parent=27 // pred_region
        _
      $region32: #{ipa_forward.2} parent=27 // pred_fallthru
        _
    $region28: #{ipa_forward.2} parent=5 // pred_fallthru
      _
    %p250 = scmp.le.s32.totalorder 2, %s8
    // Predicated region
    $region33: #{ipa_forward.2} parent=5 // pred_check
      %p251 = pneg %p250
    $region34: #{ipa_forward.2} parent=5 // pred_check_branch
      %253 = sbr.rel (%p251) target = $region36
    $region35: #{ipa_forward.2} parent=5 // pred_region
      %s254 = ssub.s32 %s8, 2
      // Predicated region
      $region37: #{ipa_forward.2} parent=35 // pred_check
        %p255 = pneg %p100
      $region38: #{ipa_forward.2} parent=35 // pred_check_branch
        %257 = sbr.rel (%p255) target = $region40
      $region39: #{ipa_forward.2} parent=35 // pred_region
        %p258 = scmp.lt.s32.totalorder %s19, 1
        %s259 = scalar_select %p258, %s19, 1
        %p260 = scmp.lt.s32.totalorder %s20, 0
        %s261 = scalar_select %p260, %s20, 0
        %s262 = sadd.s32 %s261, %s259
        %s263 = smul.addr %s262, 2
        %s264 = scalar_lea.vmem %s2, %s263
      $region40: #{ipa_forward.2} parent=35 // pred_fallthru
        _
    $region36: #{ipa_forward.2} parent=5 // pred_fallthru
      _
  $region6: #{ipa_forward.2} parent=0 // loop_footer
    %s12 = sadd.s32 1, %s8
  $region7: #{ipa_forward.2} parent=0 // loop_footer_branch
    %7 = sbr.rel target = $region3
  $region8: #{ipa_forward.2} parent=0 // loop_exit
    _

// kernel: ipa_forward.3
$region0: #{ipa_forward.3}
  #allocation0 [shape = 'u32[]', space=smem, size = 0x4, offset = 0x4, fixed_abs, tag = 'smem constant byte address 0x4 - core index']
  #allocation1 [shape = 'u32[72,128]{1,0:T(1,128)}', space=vmem, size = 0x9000, scoped, tag = 'internal scratch']
  #allocation2 [shape = 'bf16[4,8,8]{2,1,0:T(8,128)(2,1)}', space=vmem, size = 0x2000, scoped, tag = 'scratch operand']
  #allocation3 [shape = 'bf16[4,8,8]{2,1,0:T(8,128)(2,1)}', space=vmem, size = 0x2000, scoped, tag = 'scratch operand']
  #allocation4 [shape = 'bf16[4,8,8]{2,1,0:T(8,128)(2,1)}', space=vmem, size = 0x2000, scoped, tag = 'scratch operand']
  %s0 = inlined_call_operand.vmem [shape: f32[2,8,32], index: 0, kind: input, shape index: {}]
  %s1 = inlined_call_operand.vmem [shape: bf16[2,4,8,8], index: 1, kind: input, shape index: {}]
  %s2 = inlined_call_operand.vmem [shape: f32[32,32], index: 2, kind: input, shape index: {}]
  %s3 = inlined_call_operand.vmem [shape: f32[1,32], index: 3, kind: input, shape index: {}]
  %s4 = inlined_call_operand.vmem [shape: f32[32,64], index: 4, kind: input, shape index: {}]
  %s5 = inlined_call_operand.vmem [shape: f32[1,64], index: 5, kind: input, shape index: {}]
  %s6 = inlined_call_operand.vmem [shape: f32[4,1,1], index: 6, kind: input, shape index: {}]
  %s7 = inlined_call_operand.vmem [shape: f32[4,8,32], index: 7, kind: input, shape index: {}]
  %s8 = inlined_call_operand.vmem [shape: f32[1,32], index: 8, kind: input, shape index: {}]
  %s9 = inlined_call_operand.hbm [shape: f32[2,8,32], index: 9, kind: output, shape index: {}]
  %s10 = sld [smem:[#allocation0]]
  $region73: #{ipa_forward.3} parent=0
    _
  %s12 = ssub.s32 1, %s10
  %s13 = scalar_select 0, %s12, %s10
  $region1: #{ipa_forward.3} parent=0
    #allocation5 [shape = 'u8[8192]{0}', space=vmem, size = 0x2000, scoped, tag = 'output window, operand 0']
    #allocation6 [shape = 's32[2]{0}', space=sflag, size = 0x8, scoped, tag = 'scoped memory for ipa_forward.3']
    %14 = vsyncpa [#allocation6], 0
    %s15 = scalar_lea.sflag [#allocation6], 1
    %16 = vsyncpa %s15, 0
    loop: start=0, step=1, limit=4
    $region2: #{ipa_forward.3} parent=1 // loop_pre_header
      _
    $region3: #{ipa_forward.3} parent=1 // loop_header
      %s18 = sphi 0, %s22
      %p19 = scmp.ge.s32.totalorder %s18, 4
      %s25 = sphi 0, %s37
      %s26 = sphi 0, %s33
      %s27 = sphi 0, %s25
      %s28 = sphi 0, %s26
      %s29 = sphi 0, %s27
      %s30 = sphi 0, %s28
      %s40 = sphi 0, %s42
      %s43 = sphi 0, %s40
      %s44 = sphi 0, %s43
      %s60 = sphi 0, %s44
      %s68 = sphi 0, %s70
      %s71 = sphi 0, %s68
      %s72 = sphi 0, %s71
      %s88 = sphi 0, %s72
      %s92 = sphi 0, %s92
      %s94 = sphi 0, %s92
      %s95 = sphi 0, %s94
      %s109 = sphi 0, %s95
      %s113 = sphi 0, %s113
      %s115 = sphi 0, %s113
      %s116 = sphi 0, %s115
      %s130 = sphi 0, %s116
      %s134 = sphi 0, %s134
      %s136 = sphi 0, %s134
      %s137 = sphi 0, %s136
      %s151 = sphi 0, %s137
      %s155 = sphi 0, %s155
      %s157 = sphi 0, %s155
      %s158 = sphi 0, %s157
      %s172 = sphi 0, %s158
      %s176 = sphi 0, %s176
      %s178 = sphi 0, %s176
      %s179 = sphi 0, %s178
      %s193 = sphi 0, %s179
      %s197 = sphi 0, %s197
      %s199 = sphi 0, %s197
      %s200 = sphi 0, %s199
      %s214 = sphi 0, %s200
      %s218 = sphi 0, %s218
      %s220 = sphi 0, %s218
      %s221 = sphi 0, %s220
      %s235 = sphi 0, %s221
      %s243 = sphi 0, %s245
      %s246 = sphi 0, %s243
      %s247 = sphi 0, %s246
      %s263 = sphi 0, %s247
    $region4: #{ipa_forward.3} parent=1 // loop_header_branch
      %21 = sbr.rel (%p19) target = $region8
    $region5: #{ipa_forward.3} parent=1 // loop_body
      %s23 = ssub.s32 %s18, 1
      %s24 = ssub.s32 %s18, 2
      %s31 = sadd.s32 1, %s26
      %p32 = scmp.ge.s32.totalorder %s31, 1
      %s33 = scalar_select %p32, 0, %s31
      %s34 = sadd.s32 1, %s25
      %s35 = scalar_select %p32, %s34, %s25
      %p36 = scmp.ge.s32.totalorder %s35, 2
      %s37 = scalar_select %p36, 0, %s35
      %s38 = ssub.s32 %s25, %s37
      %p39 = scmp.eq.s32.totalorder %s38, 0
      %s41 = sadd.s32 %s40, 1
      %s42 = scalar_select %p39, %s40, %s41
      %p45 = pneg %p39
      %p46 = scmp.eq.s32.totalorder %s18, 1
      %p47 = por %p45, %p46
      %p48 = scmp.ne.s32.totalorder %s40, %s43
      %p49 = scmp.eq.s32.totalorder %s18, 0
      %p50 = por %p48, %p49
      %p51 = scmp.ne.s32.totalorder %s40, %s43
      %p52 = scmp.eq.s32.totalorder %s23, 1
      %p53 = por %p51, %p52
      %p54 = scmp.ne.s32.totalorder %s43, %s44
      %p55 = scmp.eq.s32.totalorder %s23, 0
      %p56 = por %p54, %p55
      %p57 = scmp.ne.s32.totalorder %s43, %s44
      %p58 = scmp.eq.s32.totalorder %s24, 1
      %p59 = por %p57, %p58
      %p61 = scmp.ne.s32.totalorder %s44, %s60
      %p62 = scmp.eq.s32.totalorder %s24, 0
      %p63 = por %p61, %p62
      %s64 = ssub.s32 %s25, %s37
      %s65 = ssub.s32 %s26, %s33
      %s66 = sor.u32 %s64, %s65
      %p67 = scmp.eq.s32.totalorder %s66, 0
      %s69 = sadd.s32 %s68, 1
      %s70 = scalar_select %p67, %s68, %s69
      %p73 = pneg %p67
      %p74 = scmp.eq.s32.totalorder %s18, 1
      %p75 = por %p73, %p74
      %p76 = scmp.ne.s32.totalorder %s68, %s71
      %p77 = scmp.eq.s32.totalorder %s18, 0
      %p78 = por %p76, %p77
      %p79 = scmp.ne.s32.totalorder %s68, %s71
      %p80 = scmp.eq.s32.totalorder %s23, 1
      %p81 = por %p79, %p80
      %p82 = scmp.ne.s32.totalorder %s71, %s72
      %p83 = scmp.eq.s32.totalorder %s23, 0
      %p84 = por %p82, %p83
      %p85 = scmp.ne.s32.totalorder %s71, %s72
      %p86 = scmp.eq.s32.totalorder %s24, 1
      %p87 = por %p85, %p86
      %p89 = scmp.ne.s32.totalorder %s72, %s88
      %p90 = scmp.eq.s32.totalorder %s24, 0
      %p91 = por %p89, %p90
      %s93 = sadd.s32 %s92, 1
      %p96 = scmp.eq.s32.totalorder %s18, 1
      %p97 = scmp.ne.s32.totalorder %s92, %s94
      %p98 = scmp.eq.s32.totalorder %s18, 0
      %p99 = por %p97, %p98
      %p100 = scmp.ne.s32.totalorder %s92, %s94
      %p101 = scmp.eq.s32.totalorder %s23, 1
      %p102 = por %p100, %p101
      %p103 = scmp.ne.s32.totalorder %s94, %s95
      %p104 = scmp.eq.s32.totalorder %s23, 0
      %p105 = por %p103, %p104
      %p106 = scmp.ne.s32.totalorder %s94, %s95
      %p107 = scmp.eq.s32.totalorder %s24, 1
      %p108 = por %p106, %p107
      %p110 = scmp.ne.s32.totalorder %s95, %s109
      %p111 = scmp.eq.s32.totalorder %s24, 0
      %p112 = por %p110, %p111
      %s114 = sadd.s32 %s113, 1
      %p117 = scmp.eq.s32.totalorder %s18, 1
      %p118 = scmp.ne.s32.totalorder %s113, %s115
      %p119 = scmp.eq.s32.totalorder %s18, 0
      %p120 = por %p118, %p119
      %p121 = scmp.ne.s32.totalorder %s113, %s115
      %p122 = scmp.eq.s32.totalorder %s23, 1
      %p123 = por %p121, %p122
      %p124 = scmp.ne.s32.totalorder %s115, %s116
      %p125 = scmp.eq.s32.totalorder %s23, 0
      %p126 = por %p124, %p125
      %p127 = scmp.ne.s32.totalorder %s115, %s116
      %p128 = scmp.eq.s32.totalorder %s24, 1
      %p129 = por %p127, %p128
      %p131 = scmp.ne.s32.totalorder %s116, %s130
      %p132 = scmp.eq.s32.totalorder %s24, 0
      %p133 = por %p131, %p132
      %s135 = sadd.s32 %s134, 1
      %p138 = scmp.eq.s32.totalorder %s18, 1
      %p139 = scmp.ne.s32.totalorder %s134, %s136
      %p140 = scmp.eq.s32.totalorder %s18, 0
      %p141 = por %p139, %p140
      %p142 = scmp.ne.s32.totalorder %s134, %s136
      %p143 = scmp.eq.s32.totalorder %s23, 1
      %p144 = por %p142, %p143
      %p145 = scmp.ne.s32.totalorder %s136, %s137
      %p146 = scmp.eq.s32.totalorder %s23, 0
      %p147 = por %p145, %p146
      %p148 = scmp.ne.s32.totalorder %s136, %s137
      %p149 = scmp.eq.s32.totalorder %s24, 1
      %p150 = por %p148, %p149
      %p152 = scmp.ne.s32.totalorder %s137, %s151
      %p153 = scmp.eq.s32.totalorder %s24, 0
      %p154 = por %p152, %p153
      %s156 = sadd.s32 %s155, 1
      %p159 = scmp.eq.s32.totalorder %s18, 1
      %p160 = scmp.ne.s32.totalorder %s155, %s157
      %p161 = scmp.eq.s32.totalorder %s18, 0
      %p162 = por %p160, %p161
      %p163 = scmp.ne.s32.totalorder %s155, %s157
      %p164 = scmp.eq.s32.totalorder %s23, 1
      %p165 = por %p163, %p164
      %p166 = scmp.ne.s32.totalorder %s157, %s158
      %p167 = scmp.eq.s32.totalorder %s23, 0
      %p168 = por %p166, %p167
      %p169 = scmp.ne.s32.totalorder %s157, %s158
      %p170 = scmp.eq.s32.totalorder %s24, 1
      %p171 = por %p169, %p170
      %p173 = scmp.ne.s32.totalorder %s158, %s172
      %p174 = scmp.eq.s32.totalorder %s24, 0
      %p175 = por %p173, %p174
      %s177 = sadd.s32 %s176, 1
      %p180 = scmp.eq.s32.totalorder %s18, 1
      %p181 = scmp.ne.s32.totalorder %s176, %s178
      %p182 = scmp.eq.s32.totalorder %s18, 0
      %p183 = por %p181, %p182
      %p184 = scmp.ne.s32.totalorder %s176, %s178
      %p185 = scmp.eq.s32.totalorder %s23, 1
      %p186 = por %p184, %p185
      %p187 = scmp.ne.s32.totalorder %s178, %s179
      %p188 = scmp.eq.s32.totalorder %s23, 0
      %p189 = por %p187, %p188
      %p190 = scmp.ne.s32.totalorder %s178, %s179
      %p191 = scmp.eq.s32.totalorder %s24, 1
      %p192 = por %p190, %p191
      %p194 = scmp.ne.s32.totalorder %s179, %s193
      %p195 = scmp.eq.s32.totalorder %s24, 0
      %p196 = por %p194, %p195
      %s198 = sadd.s32 %s197, 1
      %p201 = scmp.eq.s32.totalorder %s18, 1
      %p202 = scmp.ne.s32.totalorder %s197, %s199
      %p203 = scmp.eq.s32.totalorder %s18, 0
      %p204 = por %p202, %p203
      %p205 = scmp.ne.s32.totalorder %s197, %s199
      %p206 = scmp.eq.s32.totalorder %s23, 1
      %p207 = por %p205, %p206
      %p208 = scmp.ne.s32.totalorder %s199, %s200
      %p209 = scmp.eq.s32.totalorder %s23, 0
      %p210 = por %p208, %p209
      %p211 = scmp.ne.s32.totalorder %s199, %s200
      %p212 = scmp.eq.s32.totalorder %s24, 1
      %p213 = por %p211, %p212
      %p215 = scmp.ne.s32.totalorder %s200, %s214
      %p216 = scmp.eq.s32.totalorder %s24, 0
      %p217 = por %p215, %p216
      %s219 = sadd.s32 %s218, 1
      %p222 = scmp.eq.s32.totalorder %s18, 1
      %p223 = scmp.ne.s32.totalorder %s218, %s220
      %p224 = scmp.eq.s32.totalorder %s18, 0
      %p225 = por %p223, %p224
      %p226 = scmp.ne.s32.totalorder %s218, %s220
      %p227 = scmp.eq.s32.totalorder %s23, 1
      %p228 = por %p226, %p227
      %p229 = scmp.ne.s32.totalorder %s220, %s221
      %p230 = scmp.eq.s32.totalorder %s23, 0
      %p231 = por %p229, %p230
      %p232 = scmp.ne.s32.totalorder %s220, %s221
      %p233 = scmp.eq.s32.totalorder %s24, 1
      %p234 = por %p232, %p233
      %p236 = scmp.ne.s32.totalorder %s221, %s235
      %p237 = scmp.eq.s32.totalorder %s24, 0
      %p238 = por %p236, %p237
      %s239 = ssub.s32 %s25, %s37
      %s240 = ssub.s32 %s26, %s33
      %s241 = sor.u32 %s239, %s240
      %p242 = scmp.eq.s32.totalorder %s241, 0
      %s244 = sadd.s32 %s243, 1
      %s245 = scalar_select %p242, %s243, %s244
      %p248 = pneg %p242
      %p249 = scmp.eq.s32.totalorder %s18, 1
      %p250 = por %p248, %p249
      %p251 = scmp.ne.s32.totalorder %s243, %s246
      %p252 = scmp.eq.s32.totalorder %s18, 0
      %p253 = por %p251, %p252
      %p254 = scmp.ne.s32.totalorder %s243, %s246
      %p255 = scmp.eq.s32.totalorder %s23, 1
      %p256 = por %p254, %p255
      %p257 = scmp.ne.s32.totalorder %s246, %s247
      %p258 = scmp.eq.s32.totalorder %s23, 0
      %p259 = por %p257, %p258
      %p260 = scmp.ne.s32.totalorder %s246, %s247
      %p261 = scmp.eq.s32.totalorder %s24, 1
      %p262 = por %p260, %p261
      %p264 = scmp.ne.s32.totalorder %s247, %s263
      %p265 = scmp.eq.s32.totalorder %s24, 0
      %p266 = por %p264, %p265
      %p267 = scmp.le.s32.totalorder 1, %s18
      %p268 = scmp.lt.s32.totalorder %s18, 3
      %p269 = pnand %p267, %p268
      %p270 = pneg %p269
      // Predicated region
      $region9: #{ipa_forward.3} parent=5 // pred_check
        _
      $region10: #{ipa_forward.3} parent=5 // pred_check_branch
        %272 = sbr.rel (%p269) target = $region12
      $region11: #{ipa_forward.3} parent=5 // pred_region
        %s273 = ssub.s32 %s18, 1
        // Predicated region
        $region13: #{ipa_forward.3} parent=11 // pred_check
          %p274 = pneg %p105
        $region14: #{ipa_forward.3} parent=11 // pred_check_branch
          %276 = sbr.rel (%p274) target = $region16
        $region15: #{ipa_forward.3} parent=11 // pred_region
          _
        $region16: #{ipa_forward.3} parent=11 // pred_fallthru
          _
        // Predicated region
        $region17: #{ipa_forward.3} parent=11 // pred_check
          %p277 = pneg %p126
        $region18: #{ipa_forward.3} parent=11 // pred_check_branch
          %279 = sbr.rel (%p277) target = $region20
        $region19: #{ipa_forward.3} parent=11 // pred_region
          _
        $region20: #{ipa_forward.3} parent=11 // pred_fallthru
          _
        // Predicated region
        $region21: #{ipa_forward.3} parent=11 // pred_check
          %p280 = pneg %p147
        $region22: #{ipa_forward.3} parent=11 // pred_check_branch
          %282 = sbr.rel (%p280) target = $region24
        $region23: #{ipa_forward.3} parent=11 // pred_region
          _
        $region24: #{ipa_forward.3} parent=11 // pred_fallthru
          _
        // Predicated region
        $region25: #{ipa_forward.3} parent=11 // pred_check
          %p283 = pneg %p168
        $region26: #{ipa_forward.3} parent=11 // pred_check_branch
          %285 = sbr.rel (%p283) target = $region28
        $region27: #{ipa_forward.3} parent=11 // pred_region
          _
        $region28: #{ipa_forward.3} parent=11 // pred_fallthru
          _
        // Predicated region
        $region29: #{ipa_forward.3} parent=11 // pred_check
          %p286 = pneg %p189
        $region30: #{ipa_forward.3} parent=11 // pred_check_branch
          %288 = sbr.rel (%p286) target = $region32
        $region31: #{ipa_forward.3} parent=11 // pred_region
          _
        $region32: #{ipa_forward.3} parent=11 // pred_fallthru
          _
        // Predicated region
        $region33: #{ipa_forward.3} parent=11 // pred_check
          %p289 = pneg %p210
        $region34: #{ipa_forward.3} parent=11 // pred_check_branch
          %291 = sbr.rel (%p289) target = $region36
        $region35: #{ipa_forward.3} parent=11 // pred_region
          _
        $region36: #{ipa_forward.3} parent=11 // pred_fallthru
          _
        // Predicated region
        $region37: #{ipa_forward.3} parent=11 // pred_check
          %p292 = pneg %p231
        $region38: #{ipa_forward.3} parent=11 // pred_check_branch
          %294 = sbr.rel (%p292) target = $region40
        $region39: #{ipa_forward.3} parent=11 // pred_region
          _
        $region40: #{ipa_forward.3} parent=11 // pred_fallthru
          _
      $region12: #{ipa_forward.3} parent=5 // pred_fallthru
        _
      %p295 = scmp.lt.s32.totalorder %s18, 2
      // Predicated region
      $region41: #{ipa_forward.3} parent=5 // pred_check
        %p296 = pneg %p295
      $region42: #{ipa_forward.3} parent=5 // pred_check_branch
        %298 = sbr.rel (%p296) target = $region44
      $region43: #{ipa_forward.3} parent=5 // pred_region
        // Predicated region
        $region45: #{ipa_forward.3} parent=43 // pred_check
          %p299 = pneg %p50
        $region46: #{ipa_forward.3} parent=43 // pred_check_branch
          %301 = sbr.rel (%p299) target = $region48
        $region47: #{ipa_forward.3} parent=43 // pred_region
          %p302 = scmp.lt.s32.totalorder %s25, 1
          %s303 = scalar_select %p302, %s25, 1
          %s304 = smul.addr %s303, 8
          %s305 = scalar_lea.vmem %s0, %s304
        $region48: #{ipa_forward.3} parent=43 // pred_fallthru
          _
        // Predicated region
        $region49: #{ipa_forward.3} parent=43 // pred_check
          %p306 = pneg %p78
        $region50: #{ipa_forward.3} parent=43 // pred_check_branch
          %308 = sbr.rel (%p306) target = $region52
        $region51: #{ipa_forward.3} parent=43 // pred_region
          %p309 = scmp.lt.s32.totalorder %s25, 1
          %s310 = scalar_select %p309, %s25, 1
          %p311 = scmp.lt.s32.totalorder %s26, 0
          %s312 = scalar_select %p311, %s26, 0
          %s313 = smul.addr %s310, 4
          %s314 = sadd.s32 %s312, %s313
          %s315 = smul.addr %s314, 4
          %s316 = scalar_lea.vmem %s1, %s315
        $region52: #{ipa_forward.3} parent=43 // pred_fallthru
          _
      $region44: #{ipa_forward.3} parent=5 // pred_fallthru
        _
      %p317 = scmp.le.s32.totalorder 1, %s18
      %p318 = scmp.lt.s32.totalorder %s18, 3
      %p319 = pnand %p317, %p318
      %p320 = pneg %p319
      // Predicated region
      $region53: #{ipa_forward.3} parent=5 // pred_check
        _
      $region54: #{ipa_forward.3} parent=5 // pred_check_branch
        %322 = sbr.rel (%p319) target = $region56
      $region55: #{ipa_forward.3} parent=5 // pred_region
        %s323 = ssub.s32 %s18, 1
        %p324 = scmp.lt.s32.totalorder %s27, 1
        %s325 = scalar_select %p324, %s27, 1
        %s326 = smul.addr %s325, 8
        %s327 = scalar_lea.vmem %s0, %s326
        %p328 = pneg %p56
        %p329 = pneg %p53
        %p330 = scmp.lt.s32.totalorder %s27, 1
        %s331 = scalar_select %p330, %s27, 1
        %p332 = scmp.lt.s32.totalorder %s28, 0
        %s333 = scalar_select %p332, %s28, 0
        %s334 = smul.addr %s331, 4
        %s335 = sadd.s32 %s333, %s334
        %s336 = smul.addr %s335, 4
        %s337 = scalar_lea.vmem %s1, %s336
        %p338 = pneg %p84
        %p339 = pneg %p81
        %p340 = pneg %p105
        %p341 = pneg %p102
        %p342 = pneg %p126
        %p343 = pneg %p123
        %p344 = pneg %p147
        %p345 = pneg %p144
        %p346 = pneg %p168
        %p347 = pneg %p165
        %p348 = pneg %p189
        %p349 = pneg %p186
        %p350 = pneg %p210
        %p351 = pneg %p207
        %p352 = pneg %p231
        %p353 = pneg %p228
        %p354 = pneg %p259
        %p355 = pneg %p256
        %s356 = sand.u32 %s246, 1
        %s357 = scalar_lea.sflag [#allocation6], %s356
        %s358 = sand.u32 %s246, 1
        %s359 = smul.addr %s358, 8
        %s360 = scalar_lea.vmem [#allocation5], %s359
        %p361 = scmp.lt.s32.totalorder %s27, 1
        %s362 = scalar_select %p361, %s27, 1
        %s363 = smul.addr %s362, 8
        %s364 = scalar_lea.vmem %s0, %s363
        %p365 = scmp.lt.s32.totalorder %s27, 1
        %s366 = scalar_select %p365, %s27, 1
        %p367 = scmp.lt.s32.totalorder %s28, 0
        %s368 = scalar_select %p367, %s28, 0
        %s369 = smul.addr %s366, 4
        %s370 = sadd.s32 %s368, %s369
        %s371 = smul.addr %s370, 4
        %s372 = scalar_lea.vmem %s1, %s371
        %p374 = scmp.eq.s32.totalorder %s28, 0
        // Predicated region
        $region57: #{ipa_forward.3} parent=55 // pred_check
          %p375 = pneg %p374
        $region58: #{ipa_forward.3} parent=55 // pred_check_branch
          %377 = sbr.rel (%p375) target = $region60
        $region59: #{ipa_forward.3} parent=55 // pred_region
          %v378 = vld [vmem:[%s364] sm:$0xff]
          %v379 = vld [vmem:[%s4] sm:$0xff]
          %v380 = vld [vmem:[%s4 + $0x8] sm:$0xff]
          %v381 = vld [vmem:[%s4 + $0x10] sm:$0xff]
          %v382 = vld [vmem:[%s4 + $0x18] sm:$0xff]
          %v383 = vld [vmem:[%s5] sm:$0x1]
          %v385 = vperm.slane %v383, 0
          %vm387 = vcmask 261120
          %v389 = vsel %vm387, %v378, 0
          %391 = vmatpush.msra.mxu0 0.0
          %392 = vmatpush.msra.mxu0 0.0
          %393 = vmatpush.msra.mxu0 0.0
          %394 = vmatpush.msra.mxu0 0.0
          %395 = vmatpush.msra.mxu0 0.0
          %396 = vmatpush.msra.mxu0 0.0
          %397 = vmatpush.msra.mxu0 0.0
          %398 = vmatpush.msra.mxu0 0.0
          %399 = vmatpush.msra.mxu0 0.0
          %400 = vmatpush.msra.mxu0 0.0
          %401 = vmatpush.msra.mxu0 0.0
          %402 = vmatpush.msra.mxu0 0.0
          %403 = vmatpush.msra.mxu0 %v382
          %404 = vmatpush.msra.mxu0 %v381
          %405 = vmatpush.msra.mxu0 %v380
          %406 = vmatpush.msra.mxu0 %v379
          %407 = vmatmul.f32.gmra.mxu0 %v389
          %v408 = vpop.f32.mrf.mxu0
          %v409 = vadd.f32 %v385, %v408
          %410 = vdwg.mxu0
          %v411 = vpack.c.bf16 %v409, %v409
          %vm412 = vcmask 60416
          %413 = vst.msk [vmem:[#allocation3] sm:$0xf] %vm412, %v411
          %415 = vrot.lane.b32.xlu0 %v411, 96
          %v416 = vpop.permute.xlu0 %415
          %418 = vst.msk [vmem:[#allocation4] sm:$0xf] %vm412, %v416
          %419 = vrot.lane.b32.xlu0 %v411, 120
          %v420 = vpop.permute.xlu0 %419
          %s422 = scalar_lea.vmem [#allocation3], 4
          %423 = vst.msk [vmem:[%s422] sm:$0xf] %vm412, %v420
          %424 = vrot.lane.b32.xlu0 %v411, 88
          %v425 = vpop.permute.xlu0 %424
          %s427 = scalar_lea.vmem [#allocation4], 4
          %428 = vst.msk [vmem:[%s427] sm:$0xf] %vm412, %v425
          %429 = vrot.lane.b32.xlu0 %v411, 112
          %v430 = vpop.permute.xlu0 %429
          %s432 = scalar_lea.vmem [#allocation3], 8
          %433 = vst.msk [vmem:[%s432] sm:$0xf] %vm412, %v430
          %434 = vrot.lane.b32.xlu0 %v411, 80
          %v435 = vpop.permute.xlu0 %434
          %s437 = scalar_lea.vmem [#allocation4], 8
          %438 = vst.msk [vmem:[%s437] sm:$0xf] %vm412, %v435
          %439 = vrot.lane.b32.xlu0 %v411, 104
          %v440 = vpop.permute.xlu0 %439
          %s442 = scalar_lea.vmem [#allocation3], 12
          %443 = vst.msk [vmem:[%s442] sm:$0xf] %vm412, %v440
          %444 = vrot.lane.b32.xlu0 %v411, 72
          %v445 = vpop.permute.xlu0 %444
          %s447 = scalar_lea.vmem [#allocation4], 12
          %448 = vst.msk [vmem:[%s447] sm:$0xf] %vm412, %v445
        $region60: #{ipa_forward.3} parent=55 // pred_fallthru
          _
        %s449 = smul.u32 %s28, 8
        %s450 = scalar_lea.vmem %s364, %s449
        %v451 = vld [vmem:[%s450] sm:$0xff]
        %v452 = vld [vmem:[%s2] sm:$0xff]
        %v453 = vld [vmem:[%s2 + $0x8] sm:$0xff]
        %v454 = vld [vmem:[%s2 + $0x10] sm:$0xff]
        %v455 = vld [vmem:[%s2 + $0x18] sm:$0xff]
        %v456 = vld [vmem:[%s3] sm:$0x1]
        %v458 = vperm.slane %v456, 0
        %vm460 = vcmask 261120
        %v462 = vsel %vm460, %v451, 0
        %464 = vmatpush.msra.mxu0 0.0
        %465 = vmatpush.msra.mxu0 0.0
        %466 = vmatpush.msra.mxu0 0.0
        %467 = vmatpush.msra.mxu0 0.0
        %468 = vmatpush.msra.mxu0 0.0
        %469 = vmatpush.msra.mxu0 0.0
        %470 = vmatpush.msra.mxu0 0.0
        %471 = vmatpush.msra.mxu0 0.0
        %472 = vmatpush.msra.mxu0 0.0
        %473 = vmatpush.msra.mxu0 0.0
        %474 = vmatpush.msra.mxu0 0.0
        %475 = vmatpush.msra.mxu0 0.0
        %476 = vmatpush.msra.mxu0 %v455
        %477 = vmatpush.msra.mxu0 %v454
        %478 = vmatpush.msra.mxu0 %v453
        %479 = vmatpush.msra.mxu0 %v452
        %480 = vmatmul.f32.gmra.mxu0 %v462
        %v481 = vpop.f32.mrf.mxu0
        %v482 = vadd.f32 %v458, %v481
        %483 = vdwg.mxu0
        %v484 = vmul.f32 %v482, 0.35355338
        %v485 = vpack.c.bf16 %v484, %v484
        %vm486 = vcmask 60416
        %487 = vst.msk [vmem:[#allocation2] sm:$0xf] %vm486, %v485
        %489 = vrot.lane.b32.xlu0 %v485, 120
        %v490 = vpop.permute.xlu0 %489
        %s492 = scalar_lea.vmem [#allocation2], 4
        %493 = vst.msk [vmem:[%s492] sm:$0xf] %vm486, %v490
        %494 = vrot.lane.b32.xlu0 %v485, 112
        %v495 = vpop.permute.xlu0 %494
        %s497 = scalar_lea.vmem [#allocation2], 8
        %498 = vst.msk [vmem:[%s497] sm:$0xf] %vm486, %v495
        %499 = vrot.lane.b32.xlu0 %v485, 104
        %v500 = vpop.permute.xlu0 %499
        %s502 = scalar_lea.vmem [#allocation2], 12
        %503 = vst.msk [vmem:[%s502] sm:$0xf] %vm486, %v500
        %v504 = vld [vmem:[#allocation2] sm:$0xf]
        %v505 = vld [vmem:[#allocation2 + $0x4] sm:$0xf]
        %v506 = vld [vmem:[#allocation2 + $0x8] sm:$0xf]
        %v507 = vld [vmem:[#allocation2 + $0xc] sm:$0xf]
        %v508 = vld [vmem:[#allocation3] sm:$0xf]
        %v509 = vld [vmem:[#allocation3 + $0x4] sm:$0xf]
        %v510 = vld [vmem:[#allocation3 + $0x8] sm:$0xf]
        %v511 = vld [vmem:[#allocation3 + $0xc] sm:$0xf]
        %v512 = vld [vmem:[%s372] sm:$0xf]
        %v513 = vld [vmem:[%s372 + $0x4] sm:$0xf]
        %v514 = vld [vmem:[%s372 + $0x8] sm:$0xf]
        %v515 = vld [vmem:[%s372 + $0xc] sm:$0xf]
        %v516 = vunpack.c.l.bf16 %v512
        %v517 = vunpack.c.l.bf16 %v513
        %v518 = vunpack.c.l.bf16 %v514
        %v519 = vunpack.c.l.bf16 %v515
        %vm520 = vcmask 64512
        %v522 = vsel %vm520, %v504, 0
        %v525 = vsel %vm520, %v508, 0
        %527 = vmatpush.bf16.xpose.msra.mxu0 0
        %528 = vmatpush.bf16.xpose.msra.mxu0 0
        %529 = vmatpush.bf16.xpose.msra.mxu0 0
        %530 = vmatpush.bf16.xpose.msra.mxu0 0
        %531 = vmatpush.bf16.xpose.msra.mxu0 0
        %532 = vmatpush.bf16.xpose.msra.mxu0 0
        %533 = vmatpush.bf16.xpose.msra.mxu0 0
        %534 = vmatpush.bf16.xpose.msra.mxu0 %v525
        %535 = vmatmul.bf16.gmra.mxu0 %v522
        %v536 = vpop.f32.mrf.mxu0
        %v537 = vadd.f32 %v516, %v536
        %v538 = vpop.f32.mrf.mxu0
        %539 = vdwg.mxu0
        %v541 = vsel %vm520, %v505, 0
        %v544 = vsel %vm520, %v509, 0
        %546 = vmatpush.bf16.xpose.msra.mxu0 0
        %547 = vmatpush.bf16.xpose.msra.mxu0 0
        %548 = vmatpush.bf16.xpose.msra.mxu0 0
        %549 = vmatpush.bf16.xpose.msra.mxu0 0
        %550 = vmatpush.bf16.xpose.msra.mxu0 0
        %551 = vmatpush.bf16.xpose.msra.mxu0 0
        %552 = vmatpush.bf16.xpose.msra.mxu0 0
        %553 = vmatpush.bf16.xpose.msra.mxu0 %v544
        %554 = vmatmul.bf16.gmra.mxu0 %v541
        %v555 = vpop.f32.mrf.mxu0
        %v556 = vadd.f32 %v517, %v555
        %v557 = vpop.f32.mrf.mxu0
        %558 = vdwg.mxu0
        %v560 = vsel %vm520, %v506, 0
        %v563 = vsel %vm520, %v510, 0
        %565 = vmatpush.bf16.xpose.msra.mxu0 0
        %566 = vmatpush.bf16.xpose.msra.mxu0 0
        %567 = vmatpush.bf16.xpose.msra.mxu0 0
        %568 = vmatpush.bf16.xpose.msra.mxu0 0
        %569 = vmatpush.bf16.xpose.msra.mxu0 0
        %570 = vmatpush.bf16.xpose.msra.mxu0 0
        %571 = vmatpush.bf16.xpose.msra.mxu0 0
        %572 = vmatpush.bf16.xpose.msra.mxu0 %v563
        %573 = vmatmul.bf16.gmra.mxu0 %v560
        %v574 = vpop.f32.mrf.mxu0
        %v575 = vadd.f32 %v518, %v574
        %v576 = vpop.f32.mrf.mxu0
        %577 = vdwg.mxu0
        %v579 = vsel %vm520, %v507, 0
        %v582 = vsel %vm520, %v511, 0
        %584 = vmatpush.bf16.xpose.msra.mxu0 0
        %585 = vmatpush.bf16.xpose.msra.mxu0 0
        %586 = vmatpush.bf16.xpose.msra.mxu0 0
        %587 = vmatpush.bf16.xpose.msra.mxu0 0
        %588 = vmatpush.bf16.xpose.msra.mxu0 0
        %589 = vmatpush.bf16.xpose.msra.mxu0 0
        %590 = vmatpush.bf16.xpose.msra.mxu0 0
        %591 = vmatpush.bf16.xpose.msra.mxu0 %v582
        %592 = vmatmul.bf16.gmra.mxu0 %v579
        %v593 = vpop.f32.mrf.mxu0
        %v594 = vadd.f32 %v519, %v593
        %v595 = vpop.f32.mrf.mxu0
        %596 = vdwg.mxu0
        %v597 = vld [vmem:[%s6] sm:$0x1]
        %v598 = vld [vmem:[%s6 + $0x1] sm:$0x1]
        %v599 = vld [vmem:[%s6 + $0x2] sm:$0x1]
        %v600 = vld [vmem:[%s6 + $0x3] sm:$0x1]
        %v605 = vperm.slane %v597, 0
        %v606 = vperm.slane %v598, 0
        %v607 = vperm.slane %v599, 0
        %v608 = vperm.slane %v600, 0
        %609 = vset.pattern.permute.xlu0 0
        %610 = vperm.xlu0 %609, %v605
        %v611 = vpop.permute.xlu0 %610
        %613 = vset.pattern.permute.xlu0 0
        %614 = vperm.xlu0 %613, %v606
        %v615 = vpop.permute.xlu0 %614
        %617 = vset.pattern.permute.xlu0 0
        %618 = vperm.xlu0 %617, %v607
        %v619 = vpop.permute.xlu0 %618
        %621 = vset.pattern.permute.xlu0 0
        %622 = vperm.xlu0 %621, %v608
        %v623 = vpop.permute.xlu0 %622
        %v625 = vadd.f32 %v537, %v611
        %v626 = vadd.f32 %v556, %v615
        %v627 = vadd.f32 %v575, %v619
        %v628 = vadd.f32 %v594, %v623
        %v629 = vsel %vm520, %v625, -inf
        %630 = vmax.xlane.f32.xlu0 %v629
        %v631 = vpop.xlane.xlu0 %630
        %v632 = vsel %vm520, %v626, -inf
        %633 = vmax.xlane.f32.xlu0 %v632
        %v634 = vpop.xlane.xlu0 %633
        %v635 = vsel %vm520, %v627, -inf
        %636 = vmax.xlane.f32.xlu0 %v635
        %v637 = vpop.xlane.xlu0 %636
        %v638 = vsel %vm520, %v628, -inf
        %639 = vmax.xlane.f32.xlu0 %v638
        %v640 = vpop.xlane.xlu0 %639
        %v641 = vsub.f32 %v625, %v631
        %v642 = vsub.f32 %v626, %v634
        %v643 = vsub.f32 %v627, %v637
        %v644 = vsub.f32 %v628, %v640
        %v645 = vmul.f32 %v641, 1.442695
        %v646 = vpow.pop %v645
        %v647 = vmul.f32 %v642, 1.442695
        %v648 = vpow.pop %v647
        %v649 = vmul.f32 %v643, 1.442695
        %v650 = vpow.pop %v649
        %v651 = vmul.f32 %v644, 1.442695
        %v652 = vpow.pop %v651
        %v653 = vsel %vm520, %v646, 0.0
        %654 = vadd.xlane.f32.xlu0 %v653
        %v655 = vpop.xlane.xlu0 %654
        %v656 = vsel %vm520, %v648, 0.0
        %657 = vadd.xlane.f32.xlu0 %v656
        %v658 = vpop.xlane.xlu0 %657
        %v659 = vsel %vm520, %v650, 0.0
        %660 = vadd.xlane.f32.xlu0 %v659
        %v661 = vpop.xlane.xlu0 %660
        %v662 = vsel %vm520, %v652, 0.0
        %663 = vadd.xlane.f32.xlu0 %v662
        %v664 = vpop.xlane.xlu0 %663
        %v665 = vrcp.pop %v655
        %v666 = vrcp.pop %v658
        %v667 = vrcp.pop %v661
        %v668 = vrcp.pop %v664
        %v669 = vmul.f32 %v646, %v665
        %v670 = vmul.f32 %v648, %v666
        %v671 = vmul.f32 %v650, %v667
        %v672 = vmul.f32 %v652, %v668
        %v673 = vpack.c.bf16 %v669, %v669
        %v674 = vpack.c.bf16 %v670, %v670
        %v675 = vpack.c.bf16 %v671, %v671
        %v676 = vpack.c.bf16 %v672, %v672
        %v677 = vld [vmem:[#allocation4] sm:$0xf]
        %v678 = vld [vmem:[#allocation4 + $0x4] sm:$0xf]
        %v679 = vld [vmem:[#allocation4 + $0x8] sm:$0xf]
        %v680 = vld [vmem:[#allocation4 + $0xc] sm:$0xf]
        %v682 = vsel %vm520, %v673, 0
        %vm684 = vcmask 1043456
        %v686 = vsel %vm684, %v677, 0
        %688 = vmatpush.bf16.msra.mxu0 0
        %689 = vmatpush.bf16.msra.mxu0 0
        %690 = vmatpush.bf16.msra.mxu0 0
        %691 = vmatpush.bf16.msra.mxu0 0
        %692 = vmatpush.bf16.msra.mxu0 0
        %693 = vmatpush.bf16.msra.mxu0 0
        %694 = vmatpush.bf16.msra.mxu0 0
        %695 = vmatpush.bf16.msra.mxu0 %v686
        %696 = vmatmul.bf16.gmra.mxu0 %v682
        %v697 = vpop.f32.mrf.mxu0
        %v698 = vadd.f32 0.0, %v697
        %v699 = vpop.f32.mrf.mxu0
        %700 = vdwg.mxu0
        %v702 = vsel %vm520, %v674, 0
        %v705 = vsel %vm684, %v678, 0
        %707 = vmatpush.bf16.msra.mxu0 0
        %708 = vmatpush.bf16.msra.mxu0 0
        %709 = vmatpush.bf16.msra.mxu0 0
        %710 = vmatpush.bf16.msra.mxu0 0
        %711 = vmatpush.bf16.msra.mxu0 0
        %712 = vmatpush.bf16.msra.mxu0 0
        %713 = vmatpush.bf16.msra.mxu0 0
        %714 = vmatpush.bf16.msra.mxu0 %v705
        %715 = vmatmul.bf16.gmra.mxu0 %v702
        %v716 = vpop.f32.mrf.mxu0
        %v717 = vadd.f32 0.0, %v716
        %v718 = vpop.f32.mrf.mxu0
        %719 = vdwg.mxu0
        %v721 = vsel %vm520, %v675, 0
        %v724 = vsel %vm684, %v679, 0
        %726 = vmatpush.bf16.msra.mxu0 0
        %727 = vmatpush.bf16.msra.mxu0 0
        %728 = vmatpush.bf16.msra.mxu0 0
        %729 = vmatpush.bf16.msra.mxu0 0
        %730 = vmatpush.bf16.msra.mxu0 0
        %731 = vmatpush.bf16.msra.mxu0 0
        %732 = vmatpush.bf16.msra.mxu0 0
        %733 = vmatpush.bf16.msra.mxu0 %v724
        %734 = vmatmul.bf16.gmra.mxu0 %v721
        %v735 = vpop.f32.mrf.mxu0
        %v736 = vadd.f32 0.0, %v735
        %v737 = vpop.f32.mrf.mxu0
        %738 = vdwg.mxu0
        %v740 = vsel %vm520, %v676, 0
        %v743 = vsel %vm684, %v680, 0
        %745 = vmatpush.bf16.msra.mxu0 0
        %746 = vmatpush.bf16.msra.mxu0 0
        %747 = vmatpush.bf16.msra.mxu0 0
        %748 = vmatpush.bf16.msra.mxu0 0
        %749 = vmatpush.bf16.msra.mxu0 0
        %750 = vmatpush.bf16.msra.mxu0 0
        %751 = vmatpush.bf16.msra.mxu0 0
        %752 = vmatpush.bf16.msra.mxu0 %v743
        %753 = vmatmul.bf16.gmra.mxu0 %v740
        %v754 = vpop.f32.mrf.mxu0
        %v755 = vadd.f32 0.0, %v754
        %v756 = vpop.f32.mrf.mxu0
        %757 = vdwg.mxu0
        %v758 = vld [vmem:[%s7] sm:$0xff]
        %v759 = vld [vmem:[%s7 + $0x8] sm:$0xff]
        %v760 = vld [vmem:[%s7 + $0x10] sm:$0xff]
        %v761 = vld [vmem:[%s7 + $0x18] sm:$0xff]
        %v763 = vsel %vm520, %v698, 0
        %765 = vmatpush.msra.mxu0 0.0
        %766 = vmatpush.msra.mxu0 0.0
        %767 = vmatpush.msra.mxu0 0.0
        %768 = vmatpush.msra.mxu0 0.0
        %769 = vmatpush.msra.mxu0 0.0
        %770 = vmatpush.msra.mxu0 0.0
        %771 = vmatpush.msra.mxu0 0.0
        %772 = vmatpush.msra.mxu0 0.0
        %773 = vmatpush.msra.mxu0 0.0
        %774 = vmatpush.msra.mxu0 0.0
        %775 = vmatpush.msra.mxu0 0.0
        %776 = vmatpush.msra.mxu0 0.0
        %777 = vmatpush.msra.mxu0 0.0
        %778 = vmatpush.msra.mxu0 0.0
        %779 = vmatpush.msra.mxu0 0.0
        %780 = vmatpush.msra.mxu0 %v758
        %781 = vmatmul.f32.gmra.mxu0 %v763
        %v782 = vpop.f32.mrf.mxu0
        %v783 = vadd.f32 0.0, %v782
        %784 = vdwg.mxu0
        %v786 = vsel %vm520, %v717, 0
        %788 = vmatpush.msra.mxu0 0.0
        %789 = vmatpush.msra.mxu0 0.0
        %790 = vmatpush.msra.mxu0 0.0
        %791 = vmatpush.msra.mxu0 0.0
        %792 = vmatpush.msra.mxu0 0.0
        %793 = vmatpush.msra.mxu0 0.0
        %794 = vmatpush.msra.mxu0 0.0
        %795 = vmatpush.msra.mxu0 0.0
        %796 = vmatpush.msra.mxu0 0.0
        %797 = vmatpush.msra.mxu0 0.0
        %798 = vmatpush.msra.mxu0 0.0
        %799 = vmatpush.msra.mxu0 0.0
        %800 = vmatpush.msra.mxu0 0.0
        %801 = vmatpush.msra.mxu0 0.0
        %802 = vmatpush.msra.mxu0 0.0
        %803 = vmatpush.msra.mxu0 %v759
        %804 = vmatmul.f32.gmra.mxu0 %v786
        %v805 = vpop.f32.mrf.mxu0
        %v806 = vadd.f32 0.0, %v805
        %807 = vdwg.mxu0
        %v809 = vsel %vm520, %v736, 0
        %811 = vmatpush.msra.mxu0 0.0
        %812 = vmatpush.msra.mxu0 0.0
        %813 = vmatpush.msra.mxu0 0.0
        %814 = vmatpush.msra.mxu0 0.0
        %815 = vmatpush.msra.mxu0 0.0
        %816 = vmatpush.msra.mxu0 0.0
        %817 = vmatpush.msra.mxu0 0.0
        %818 = vmatpush.msra.mxu0 0.0
        %819 = vmatpush.msra.mxu0 0.0
        %820 = vmatpush.msra.mxu0 0.0
        %821 = vmatpush.msra.mxu0 0.0
        %822 = vmatpush.msra.mxu0 0.0
        %823 = vmatpush.msra.mxu0 0.0
        %824 = vmatpush.msra.mxu0 0.0
        %825 = vmatpush.msra.mxu0 0.0
        %826 = vmatpush.msra.mxu0 %v760
        %827 = vmatmul.f32.gmra.mxu0 %v809
        %v828 = vpop.f32.mrf.mxu0
        %v829 = vadd.f32 0.0, %v828
        %830 = vdwg.mxu0
        %v832 = vsel %vm520, %v755, 0
        %834 = vmatpush.msra.mxu0 0.0
        %835 = vmatpush.msra.mxu0 0.0
        %836 = vmatpush.msra.mxu0 0.0
        %837 = vmatpush.msra.mxu0 0.0
        %838 = vmatpush.msra.mxu0 0.0
        %839 = vmatpush.msra.mxu0 0.0
        %840 = vmatpush.msra.mxu0 0.0
        %841 = vmatpush.msra.mxu0 0.0
        %842 = vmatpush.msra.mxu0 0.0
        %843 = vmatpush.msra.mxu0 0.0
        %844 = vmatpush.msra.mxu0 0.0
        %845 = vmatpush.msra.mxu0 0.0
        %846 = vmatpush.msra.mxu0 0.0
        %847 = vmatpush.msra.mxu0 0.0
        %848 = vmatpush.msra.mxu0 0.0
        %849 = vmatpush.msra.mxu0 %v761
        %850 = vmatmul.f32.gmra.mxu0 %v832
        %v851 = vpop.f32.mrf.mxu0
        %v852 = vadd.f32 0.0, %v851
        %853 = vdwg.mxu0
        %v854 = vsel %vm460, %v783, 0.0
        %v855 = vsel %vm460, %v806, 0.0
        %v856 = vadd.f32 %v854, %v855
        %v857 = vsel %vm460, %v829, 0.0
        %v858 = vadd.f32 %v856, %v857
        %v859 = vsel %vm460, %v852, 0.0
        %v860 = vadd.f32 %v858, %v859
        %v861 = vld [vmem:[%s8] sm:$0x1]
        %v863 = vperm.slane %v861, 0
        %v865 = vadd.f32 %v860, %v863
        %v866 = vadd.f32 %v451, %v865
        %867 = vst.msk [vmem:[%s360] sm:$0xff] %vm460, %v866
        %s868 = sand.u32 %s246, 1
        %s869 = scalar_lea.sflag [#allocation6], %s868
        %s870 = sand.u32 %s246, 1
        %s871 = smul.addr %s870, 8
        %s872 = scalar_lea.vmem [#allocation5], %s871
        // Predicated region
        $region61: #{ipa_forward.3} parent=55 // pred_check
          %p873 = pneg %p256
        $region62: #{ipa_forward.3} parent=55 // pred_check_branch
          %875 = sbr.rel (%p873) target = $region64
        $region63: #{ipa_forward.3} parent=55 // pred_region
          %877 = vsyncadd %s869, 0
          %s878 = sadd.s32 %s28, %s27
          %s879 = smul.addr %s878, 8
          %s880 = scalar_lea.hbm %s9, %s879
          %s882 = sshll.u32 %s872, 4
          %s883 = int_to_ptr.vmem [resolvable:$true] %s882
          %s884 = sshll.u32 %s880, 4
          %s885 = int_to_ptr.hbm [resolvable:$true] %s884
          %887 = dma.vmem_to_hbm [thread:$0]  %s883, 128, %s885, %s869
        $region64: #{ipa_forward.3} parent=55 // pred_fallthru
          _
      $region56: #{ipa_forward.3} parent=5 // pred_fallthru
        _
      %p888 = scmp.le.s32.totalorder 2, %s18
      // Predicated region
      $region65: #{ipa_forward.3} parent=5 // pred_check
        %p889 = pneg %p888
      $region66: #{ipa_forward.3} parent=5 // pred_check_branch
        %891 = sbr.rel (%p889) target = $region68
      $region67: #{ipa_forward.3} parent=5 // pred_region
        %s892 = ssub.s32 %s18, 2
        // Predicated region
        $region69: #{ipa_forward.3} parent=67 // pred_check
          %p893 = pneg %p262
        $region70: #{ipa_forward.3} parent=67 // pred_check_branch
          %895 = sbr.rel (%p893) target = $region72
        $region71: #{ipa_forward.3} parent=67 // pred_region
          %s896 = sand.u32 %s247, 1
          %s897 = scalar_lea.sflag [#allocation6], %s896
          %s898 = sand.u32 %s247, 1
          %s899 = smul.addr %s898, 8
          %s900 = scalar_lea.vmem [#allocation5], %s899
          %902 = dma.done %s897, 128
        $region72: #{ipa_forward.3} parent=67 // pred_fallthru
          _
      $region68: #{ipa_forward.3} parent=5 // pred_fallthru
        _
    $region6: #{ipa_forward.3} parent=1 // loop_footer
      %s22 = sadd.s32 1, %s18
    $region7: #{ipa_forward.3} parent=1 // loop_footer_branch
      %17 = sbr.rel target = $region3
    $region8: #{ipa_forward.3} parent=1 // loop_exit
      _
    %903 = vsyncpa [#allocation6], 1
    %s904 = scalar_lea.sflag [#allocation6], 1
    %905 = vsyncpa %s904, 1

</llo_original>
